<compile_context>
chip_gen: v7x
topology: tpu7x:2x2x1
jax: 0.10.0
libtpu: 0.0.40
codegen_flags: <defaults>
</compile_context>

<pallas_src>
import functools
import math

import jax
import jax.numpy as jnp
from jax.experimental import pallas as pl
from jax.experimental.pallas import tpu as pltpu


def _coattn_kernel(q_ref, k_ref, v_ref,
                   wq_ref, bq_ref, wk_ref, bk_ref, wv_ref, bv_ref,
                   gamma_ref, beta_ref,
                   out_ref, att_ref,
                   *, num_heads, has_residual):
    bblk, lq, e = q_ref.shape
    _, lk, _ = k_ref.shape
    u = wk_ref.shape[1]
    h = num_heads
    c = u // h                               # key_dim = num_units // num_heads
    blq = bblk * lq
    blk = bblk * lk
    scale = 1.0 / math.sqrt(float(c))

    # ---- projections: only the column blocks that are actually consumed ----
    #   queries -> [Q | res_k], keys -> [K], values -> [V | res_q]
    yq = jnp.dot(q_ref[...].reshape(blq, e), wq_ref[...],
                 preferred_element_type=jnp.float32) + bq_ref[...]
    yq = jnp.maximum(yq, 0.0)                                    # (blq, u or 2u) f32
    yk = jnp.dot(k_ref[...].reshape(blk, e), wk_ref[...],
                 preferred_element_type=jnp.float32) + bk_ref[...]
    yk = jnp.maximum(yk, 0.0)                                    # (blk, u) f32
    yv = jnp.dot(v_ref[...].reshape(blk, e), wv_ref[...],
                 preferred_element_type=jnp.float32) + bv_ref[...]
    yv = jnp.maximum(yv, 0.0)                                    # (blk, u or 2u) f32

    # bf16 operands for the MXU, cast exactly once.  The 1/sqrt(key_dim) scale
    # is folded into K (K is only ever used for the scores).
    q_bf = yq[:, :u].astype(jnp.bfloat16).reshape(bblk, lq, u)
    k_bf = (yk * scale).astype(jnp.bfloat16).reshape(bblk, lk, u)
    v_bf = yv[:, :u].astype(jnp.bfloat16).reshape(bblk, lk, u)

    v_parts = []
    q_parts = []
    # Per-head processing (h is small and static): each head is a static lane
    # slice; every matmul is one batched dot over the bblk batch dim, and the
    # (scaled, pre-softmax) logits are stored directly into att_ref[head].
    # NOTE: per-head (lq, c) x (c, lk) tiles underfill the MXU when
    # c = U/H < 128 (or L < 128); prefer num_heads such that c >= 128.
    for i in range(h):
        q_i = q_bf[:, :, i * c:(i + 1) * c]                      # (bblk, lq, c)
        k_i = k_bf[:, :, i * c:(i + 1) * c]                      # (bblk, lk, c)
        v_i = v_bf[:, :, i * c:(i + 1) * c]                      # (bblk, lk, c)

        # scores (already scaled); torch clones them into ret_weights here.
        w_i = jnp.einsum('bqc,bkc->bqk', q_i, k_i,
                         preferred_element_type=jnp.float32)     # (bblk, lq, lk) f32
        att_ref[i] = w_i.astype(att_ref.dtype)

        # ---- shared-exp softmaxes: one full-size exp serves both ----
        # softmax over keys (torch Softmax(dim=2)) with per-row max (robust).
        m_row = jnp.max(w_i, axis=-1, keepdims=True)             # (bblk, lq, 1)
        e_w = jnp.exp(w_i - m_row)
        p_k = e_w * pl.reciprocal(jnp.sum(e_w, axis=-1, keepdims=True),
                                  approx=True)

        # softmax over queries (torch Softmax(dim=1)): reuse e_w with the cheap
        # per-row correction exp(m_row - m_glob) instead of a second full exp.
        m_glob = jnp.max(m_row, axis=-2, keepdims=True)          # (bblk, 1, 1)
        f_w = e_w * jnp.exp(m_row - m_glob)                      # == exp(w_i - m_glob)
        f_t = jnp.swapaxes(f_w, -1, -2)                          # (bblk, lk, lq)
        p_qt = f_t * pl.reciprocal(jnp.sum(f_t, axis=-1, keepdims=True),
                                   approx=True)
        # p_qt == softmax_q(w_i).transpose(1, 2); dropout(keep_prob=1) == id.

        # ---- attention outputs (bf16 operands, f32 accumulation) ----
        v_parts.append(jnp.einsum('bqk,bkc->bqc', p_k.astype(jnp.bfloat16), v_i,
                                  preferred_element_type=jnp.float32))
        q_parts.append(jnp.einsum('bkq,bqc->bkc', p_qt.astype(jnp.bfloat16), q_i,
                                  preferred_element_type=jnp.float32))

    # merge heads: torch cat(split(., B, dim=0), dim=2) == lane-axis concat.
    v_full = jnp.concatenate(v_parts, axis=-1)                   # (bblk, lq, u)
    q_full = jnp.concatenate(q_parts, axis=-1)                   # (bblk, lk, u)

    if has_residual:
        v_full = v_full + yq[:, u:].reshape(bblk, lq, u)   # relu(queries @ W_res_k)
        q_full = q_full + yv[:, u:].reshape(bblk, lk, u)   # relu(values  @ W_res_q)

    out = jnp.maximum(v_full + q_full, 0.0)        # requires lq == lk (wrapper checks)

    # ---- LayerNorm over num_units (eps=1e-5, affine), f32 ----
    mean = jnp.mean(out, axis=-1, keepdims=True)
    var = jnp.mean(jnp.square(out - mean), axis=-1, keepdims=True)
    normed = (out - mean) * jax.lax.rsqrt(var + 1e-5)
    out_ref[...] = (normed * gamma_ref[...] + beta_ref[...]).astype(out_ref.dtype)


def _estimate_vmem_bytes(block_b, seq, e_dim, u_dim, n_heads, has_residual):
    """Conservative per-grid-step VMEM working-set estimate (bytes)."""
    rows = block_b * seq
    q_cols = (2 if has_residual else 1) * u_dim
    v_cols = (2 if has_residual else 1) * u_dim
    k_cols = u_dim
    tot_cols = q_cols + k_cols + v_cols
    b = 0
    b += 2 * 3 * rows * e_dim * 2                          # double-buffered bf16 q/k/v
    b += 2 * (tot_cols * e_dim * 2 + tot_cols * 4 + 2 * u_dim * 4)  # weights/biases/LN (dbuf)
    b += rows * tot_cols * 4                               # f32 projection activations
    b += 3 * rows * u_dim * 2                              # bf16 attention operands
    b += 6 * n_heads * block_b * seq * seq * 4             # score temporaries + dbuf att
    b += 6 * rows * u_dim * 4                              # merged/LN temps + dbuf output
    return b


def multihead_coattention(queries, keys, values, params, *, num_heads=2,
                          has_residual=True, block_b=None,
                          att_dtype=jnp.float32,
                          vmem_budget_bytes=20 * 1024 * 1024):
    B, Lq, E = queries.shape
    Bk, Lk, Ek = keys.shape
    Bv, Lv, Ev = values.shape
    if not (B == Bk == Bv and E == Ek == Ev):
        raise ValueError("queries/keys/values must share batch and embedding dims")
    if not (Lq == Lk == Lv):
        raise ValueError(
            f"MultiheadCoattention requires equal sequence lengths (got Lq={Lq}, "
            f"Lk={Lk}, Lv={Lv}); v_out + q_out needs matching shapes.")
    U = params["wq"].shape[1]
    if U % num_heads:
        raise ValueError("num_units must be divisible by num_heads")

    # ---- pack projection weights so only consumed column blocks are computed ----
    if has_residual:
        w_q = jnp.concatenate([params["wq"], params["wrk"]], axis=1)   # (E, 2U)
        b_q = jnp.concatenate([params["bq"], params["brk"]], axis=1)
        w_v = jnp.concatenate([params["wv"], params["wrq"]], axis=1)   # (E, 2U)
        b_v = jnp.concatenate([params["bv"], params["brq"]], axis=1)
    else:
        w_q, b_q = params["wq"], params["bq"]
        w_v, b_v = params["wv"], params["bv"]
    w_k, b_k = params["wk"], params["bk"]

    w_q = w_q.astype(jnp.bfloat16)
    w_k = w_k.astype(jnp.bfloat16)
    w_v = w_v.astype(jnp.bfloat16)
    b_q = b_q.astype(jnp.float32)
    b_k = b_k.astype(jnp.float32)
    b_v = b_v.astype(jnp.float32)
    qcols = w_q.shape[1]
    vcols = w_v.shape[1]

    # ---- VMEM-aware batch-block size ----
    est = functools.partial(_estimate_vmem_bytes, seq=Lq, e_dim=E, u_dim=U,
                            n_heads=num_heads, has_residual=has_residual)
    if block_b is None:
        # target ~512 projection rows per step (amortizes ~0.35us/step overhead),
        # rounded down to a divisor of B, then capped by the VMEM budget.
        bb = min(B, max(1, 512 // max(Lq, 1)))
        while B % bb:
            bb -= 1
        while bb > 1 and est(bb) > vmem_budget_bytes:
            bb -= 1
            while B % bb:
                bb -= 1
        # Keep at least 2 grid steps so v7x's two TensorCores both get work.
        if B // bb < 2 and B > 1:
            nb = 1
            for d in range(bb - 1, 0, -1):
                if B % d == 0:
                    nb = d
                    break
            bb = nb
        block_b = bb
    if B % block_b:
        raise ValueError("block_b must divide the batch size")
    grid = (B // block_b,)

    q_in = queries.astype(jnp.bfloat16)
    k_in = keys.astype(jnp.bfloat16)
    v_in = values.astype(jnp.bfloat16)

    kernel = functools.partial(_coattn_kernel,
                               num_heads=num_heads,
                               has_residual=has_residual)

    batched = lambda i: (i, 0, 0)
    const2 = lambda i: (0, 0)
    in_specs = [
        pl.BlockSpec((block_b, Lq, E), batched),      # queries
        pl.BlockSpec((block_b, Lk, E), batched),      # keys
        pl.BlockSpec((block_b, Lk, E), batched),      # values
        pl.BlockSpec((E, qcols), const2),             # [Wq | Wres_k]
        pl.BlockSpec((1, qcols), const2),
        pl.BlockSpec((E, U), const2),                 # Wk
        pl.BlockSpec((1, U), const2),
        pl.BlockSpec((E, vcols), const2),             # [Wv | Wres_q]
        pl.BlockSpec((1, vcols), const2),
        pl.BlockSpec((1, U), const2),                 # LayerNorm gamma
        pl.BlockSpec((1, U), const2),                 # LayerNorm beta
    ]
    out_specs = (
        pl.BlockSpec((block_b, Lq, U), batched),
        pl.BlockSpec((num_heads, block_b, Lq, Lk), lambda i: (0, i, 0, 0)),
    )
    out_shapes = (
        jax.ShapeDtypeStruct((B, Lq, U), jnp.float32),
        jax.ShapeDtypeStruct((num_heads, B, Lq, Lk), att_dtype),
    )

    outputs, att = pl.pallas_call(
        kernel,
        grid=grid,
        in_specs=in_specs,
        out_specs=out_specs,
        out_shape=out_shapes,
        compiler_params=pltpu.CompilerParams(
            dimension_semantics=("parallel",),
            vmem_limit_bytes=64 * 1024 * 1024),
    )(q_in, k_in, v_in, w_q, b_q, w_k, b_k, w_v, b_v,
      params["gamma"].astype(jnp.float32), params["beta"].astype(jnp.float32))

    # torch.cat(torch.split(., dim=2), dim=0) ordering => index = h*B + b
    ret_weights = att.reshape(num_heads * B, Lq, Lk)
    return outputs, ret_weights


def init_params(key, embedding_dim, num_units):
    ks = jax.random.split(key, 12)
    scale = 1.0 / jnp.sqrt(jnp.float32(embedding_dim))

    def w(k):
        return jax.random.normal(k, (embedding_dim, num_units), jnp.float32) * scale

    def b(k):
        return jax.random.normal(k, (1, num_units), jnp.float32) * 0.01

    return {
        "wq": w(ks[0]), "bq": b(ks[1]),
        "wk": w(ks[2]), "bk": b(ks[3]),
        "wv": w(ks[4]), "bv": b(ks[5]),
        "wrk": w(ks[6]), "brk": b(ks[7]),
        "wrq": w(ks[8]), "brq": b(ks[9]),
        "gamma": jnp.ones((1, num_units), jnp.float32)
                 + 0.1 * jax.random.normal(ks[10], (1, num_units), jnp.float32),
        "beta": 0.1 * jax.random.normal(ks[11], (1, num_units), jnp.float32),
    }


if __name__ == "__main__":
    B, L, E, U, H = 2, 8, 32, 32, 2   # batch, seq, embedding_dim, num_units, num_heads

    root = jax.random.PRNGKey(0)
    k_q, k_k, k_v, k_p = jax.random.split(root, 4)

    queries = jax.random.normal(k_q, (B, L, E), jnp.float32)
    keys = jax.random.normal(k_k, (B, L, E), jnp.float32)
    values = jax.random.normal(k_v, (B, L, E), jnp.float32)
    params = init_params(k_p, E, U)

    outputs, ret_weights = multihead_coattention(
        queries, keys, values, params, num_heads=H, has_residual=True)
    jax.block_until_ready((outputs, ret_weights))

    assert outputs.shape == (B, L, U)
    assert ret_weights.shape == (H * B, L, L)
    print("KERNEL_OK")
</pallas_src>

<mosaic_0001>
module attributes {stable_mosaic.version = 11 : i64} {
  func.func @_coattn_kernel(%arg0: i32, %arg1: memref<1x8x32xbf16, #tpu.memory_space<vmem>>, %arg2: memref<1x8x32xbf16, #tpu.memory_space<vmem>>, %arg3: memref<1x8x32xbf16, #tpu.memory_space<vmem>>, %arg4: memref<32x64xbf16, #tpu.memory_space<vmem>>, %arg5: memref<1x64xf32, #tpu.memory_space<vmem>>, %arg6: memref<32x32xbf16, #tpu.memory_space<vmem>>, %arg7: memref<1x32xf32, #tpu.memory_space<vmem>>, %arg8: memref<32x64xbf16, #tpu.memory_space<vmem>>, %arg9: memref<1x64xf32, #tpu.memory_space<vmem>>, %arg10: memref<1x32xf32, #tpu.memory_space<vmem>>, %arg11: memref<1x32xf32, #tpu.memory_space<vmem>>, %arg12: memref<1x8x32xf32, #tpu.memory_space<vmem>>, %arg13: memref<2x1x8x8xf32, #tpu.memory_space<vmem>>) attributes {dimension_semantics = [#tpu.dimension_semantics<parallel>], iteration_bounds = array<i64: 2>, scalar_prefetch = 0 : i64, scratch_operands = 0 : i64, tpu.core_type = #tpu.core_type<tc>, window_params = [{transform_indices = @transform_0, window_bounds = array<i64: 1, 8, 32>}, {transform_indices = @transform_1, window_bounds = array<i64: 1, 8, 32>}, {transform_indices = @transform_2, window_bounds = array<i64: 1, 8, 32>}, {pipeline_mode = #tpu.pipeline_mode<synchronous>, transform_indices = @transform_3, window_bounds = array<i64: 32, 64>}, {pipeline_mode = #tpu.pipeline_mode<synchronous>, transform_indices = @transform_4, window_bounds = array<i64: 1, 64>}, {pipeline_mode = #tpu.pipeline_mode<synchronous>, transform_indices = @transform_5, window_bounds = array<i64: 32, 32>}, {pipeline_mode = #tpu.pipeline_mode<synchronous>, transform_indices = @transform_6, window_bounds = array<i64: 1, 32>}, {pipeline_mode = #tpu.pipeline_mode<synchronous>, transform_indices = @transform_7, window_bounds = array<i64: 32, 64>}, {pipeline_mode = #tpu.pipeline_mode<synchronous>, transform_indices = @transform_8, window_bounds = array<i64: 1, 64>}, {pipeline_mode = #tpu.pipeline_mode<synchronous>, transform_indices = @transform_9, window_bounds = array<i64: 1, 32>}, {pipeline_mode = #tpu.pipeline_mode<synchronous>, transform_indices = @transform_10, window_bounds = array<i64: 1, 32>}, {transform_indices = @transform_11, window_bounds = array<i64: 1, 8, 32>}, {transform_indices = @transform_12, window_bounds = array<i64: 2, 1, 8, 8>}]} {
    %c0 = arith.constant 0 : index
    %c0_0 = arith.constant 0 : index
    %c0_1 = arith.constant 0 : index
    %0 = vector.load %arg1[%c0, %c0_0, %c0_1] : memref<1x8x32xbf16, #tpu.memory_space<vmem>>, vector<1x8x32xbf16>
    %1 = vector.shape_cast %0 : vector<1x8x32xbf16> to vector<8x32xbf16>
    %c0_2 = arith.constant 0 : index
    %c0_3 = arith.constant 0 : index
    %2 = vector.load %arg4[%c0_2, %c0_3] : memref<32x64xbf16, #tpu.memory_space<vmem>>, vector<32x64xbf16>
    %cst = arith.constant dense<0.000000e+00> : vector<8x64xf32>
    %3 = tpu.matmul %1, %2, %cst {dimension_numbers = #tpu.dot_dimension_numbers<[1], [0], [0], [1], [0, 0, 1, 1], [], []>} : vector<8x32xbf16>, vector<32x64xbf16>, vector<8x64xf32> -> vector<8x64xf32>
    %c0_4 = arith.constant 0 : index
    %c0_5 = arith.constant 0 : index
    %4 = vector.load %arg5[%c0_4, %c0_5] : memref<1x64xf32, #tpu.memory_space<vmem>>, vector<1x64xf32>
    %5 = vector.broadcast %4 : vector<1x64xf32> to vector<8x64xf32>
    %6 = arith.addf %3, %5 : vector<8x64xf32>
    %cst_6 = arith.constant 0.000000e+00 : f32
    %7 = vector.broadcast %cst_6 : f32 to vector<8x64xf32>
    %8 = arith.maximumf %6, %7 : vector<8x64xf32>
    %c0_7 = arith.constant 0 : index
    %c0_8 = arith.constant 0 : index
    %c0_9 = arith.constant 0 : index
    %9 = vector.load %arg2[%c0_7, %c0_8, %c0_9] : memref<1x8x32xbf16, #tpu.memory_space<vmem>>, vector<1x8x32xbf16>
    %10 = vector.shape_cast %9 : vector<1x8x32xbf16> to vector<8x32xbf16>
    %c0_10 = arith.constant 0 : index
    %c0_11 = arith.constant 0 : index
    %11 = vector.load %arg6[%c0_10, %c0_11] : memref<32x32xbf16, #tpu.memory_space<vmem>>, vector<32x32xbf16>
    %cst_12 = arith.constant dense<0.000000e+00> : vector<8x32xf32>
    %12 = tpu.matmul %10, %11, %cst_12 {dimension_numbers = #tpu.dot_dimension_numbers<[1], [0], [0], [1], [0, 0, 1, 1], [], []>} : vector<8x32xbf16>, vector<32x32xbf16>, vector<8x32xf32> -> vector<8x32xf32>
    %c0_13 = arith.constant 0 : index
    %c0_14 = arith.constant 0 : index
    %13 = vector.load %arg7[%c0_13, %c0_14] : memref<1x32xf32, #tpu.memory_space<vmem>>, vector<1x32xf32>
    %14 = vector.broadcast %13 : vector<1x32xf32> to vector<8x32xf32>
    %15 = arith.addf %12, %14 : vector<8x32xf32>
    %cst_15 = arith.constant 0.000000e+00 : f32
    %16 = vector.broadcast %cst_15 : f32 to vector<8x32xf32>
    %17 = arith.maximumf %15, %16 : vector<8x32xf32>
    %c0_16 = arith.constant 0 : index
    %c0_17 = arith.constant 0 : index
    %c0_18 = arith.constant 0 : index
    %18 = vector.load %arg3[%c0_16, %c0_17, %c0_18] : memref<1x8x32xbf16, #tpu.memory_space<vmem>>, vector<1x8x32xbf16>
    %19 = vector.shape_cast %18 : vector<1x8x32xbf16> to vector<8x32xbf16>
    %c0_19 = arith.constant 0 : index
    %c0_20 = arith.constant 0 : index
    %20 = vector.load %arg8[%c0_19, %c0_20] : memref<32x64xbf16, #tpu.memory_space<vmem>>, vector<32x64xbf16>
    %cst_21 = arith.constant dense<0.000000e+00> : vector<8x64xf32>
    %21 = tpu.matmul %19, %20, %cst_21 {dimension_numbers = #tpu.dot_dimension_numbers<[1], [0], [0], [1], [0, 0, 1, 1], [], []>} : vector<8x32xbf16>, vector<32x64xbf16>, vector<8x64xf32> -> vector<8x64xf32>
    %c0_22 = arith.constant 0 : index
    %c0_23 = arith.constant 0 : index
    %22 = vector.load %arg9[%c0_22, %c0_23] : memref<1x64xf32, #tpu.memory_space<vmem>>, vector<1x64xf32>
    %23 = vector.broadcast %22 : vector<1x64xf32> to vector<8x64xf32>
    %24 = arith.addf %21, %23 : vector<8x64xf32>
    %cst_24 = arith.constant 0.000000e+00 : f32
    %25 = vector.broadcast %cst_24 : f32 to vector<8x64xf32>
    %26 = arith.maximumf %24, %25 : vector<8x64xf32>
    %27 = vector.extract_strided_slice %8 {offsets = [0, 0], sizes = [8, 32], strides = [1, 1]} : vector<8x64xf32> to vector<8x32xf32>
    %28 = arith.truncf %27 : vector<8x32xf32> to vector<8x32xbf16>
    %29 = vector.shape_cast %28 : vector<8x32xbf16> to vector<1x8x32xbf16>
    %cst_25 = arith.constant 2.500000e-01 : f32
    %30 = vector.broadcast %cst_25 : f32 to vector<8x32xf32>
    %31 = arith.mulf %17, %30 : vector<8x32xf32>
    %32 = arith.truncf %31 : vector<8x32xf32> to vector<8x32xbf16>
    %33 = vector.shape_cast %32 : vector<8x32xbf16> to vector<1x8x32xbf16>
    %34 = vector.extract_strided_slice %26 {offsets = [0, 0], sizes = [8, 32], strides = [1, 1]} : vector<8x64xf32> to vector<8x32xf32>
    %35 = arith.truncf %34 : vector<8x32xf32> to vector<8x32xbf16>
    %36 = vector.shape_cast %35 : vector<8x32xbf16> to vector<1x8x32xbf16>
    %37 = vector.extract_strided_slice %29 {offsets = [0, 0, 0], sizes = [1, 8, 16], strides = [1, 1, 1]} : vector<1x8x32xbf16> to vector<1x8x16xbf16>
    %38 = vector.extract_strided_slice %33 {offsets = [0, 0, 0], sizes = [1, 8, 16], strides = [1, 1, 1]} : vector<1x8x32xbf16> to vector<1x8x16xbf16>
    %39 = vector.extract_strided_slice %36 {offsets = [0, 0, 0], sizes = [1, 8, 16], strides = [1, 1, 1]} : vector<1x8x32xbf16> to vector<1x8x16xbf16>
    "tpu.trace_start"() <{level = 10 : i32, message = "bqc,bkc->bqk"}> : () -> ()
    %cst_26 = arith.constant dense<0.000000e+00> : vector<1x8x8xf32>
    %40 = tpu.matmul %37, %38, %cst_26 {dimension_numbers = #tpu.dot_dimension_numbers<[2], [2], [1], [1], [0, 0, 0, 1, 1, 1], [0], [0]>} : vector<1x8x16xbf16>, vector<1x8x16xbf16>, vector<1x8x8xf32> -> vector<1x8x8xf32>
    "tpu.trace_stop"() : () -> ()
    %c0_27 = arith.constant 0 : index
    %c0_28 = arith.constant 0 : index
    %c0_29 = arith.constant 0 : index
    %c0_30 = arith.constant 0 : index
    %41 = vector.load %arg13[%c0_27, %c0_28, %c0_29, %c0_30] : memref<2x1x8x8xf32, #tpu.memory_space<vmem>>, vector<1x1x8x8xf32>
    %42 = vector.shape_cast %41 : vector<1x1x8x8xf32> to vector<1x8x8xf32>
    %43 = vector.shape_cast %40 : vector<1x8x8xf32> to vector<1x1x8x8xf32>
    tpu.vector_store %arg13[%c0_27, %c0_28, %c0_29, %c0_30], %43 {strides = array<i32>} : memref<2x1x8x8xf32, #tpu.memory_space<vmem>>, vector<1x1x8x8xf32>,
    %cst_31 = arith.constant dense<0xFF800000> : vector<1x8xf32>
    %44 = vector.multi_reduction <maximumf>, %40, %cst_31 [2] : vector<1x8x8xf32> to vector<1x8xf32>
    %45 = vector.shape_cast %44 : vector<1x8xf32> to vector<1x8x1xf32>
    %46 = vector.broadcast %45 : vector<1x8x1xf32> to vector<1x8x8xf32>
    %47 = arith.subf %40, %46 : vector<1x8x8xf32>
    %48 = math.exp %47 : vector<1x8x8xf32>
    %cst_32 = arith.constant dense<0.000000e+00> : vector<1x8xf32>
    %49 = vector.multi_reduction <add>, %48, %cst_32 [2] : vector<1x8x8xf32> to vector<1x8xf32>
    %50 = vector.shape_cast %49 : vector<1x8xf32> to vector<1x8x1xf32>
    %51 = tpu.reciprocal %50 {approx = true} : vector<1x8x1xf32> -> vector<1x8x1xf32>
    %52 = vector.broadcast %51 : vector<1x8x1xf32> to vector<1x8x8xf32>
    %53 = arith.mulf %48, %52 : vector<1x8x8xf32>
    %cst_33 = arith.constant dense<0xFF800000> : vector<1x1xf32>
    %54 = vector.multi_reduction <maximumf>, %45, %cst_33 [1] : vector<1x8x1xf32> to vector<1x1xf32>
    %55 = vector.shape_cast %54 : vector<1x1xf32> to vector<1x1x1xf32>
    %56 = vector.broadcast %55 : vector<1x1x1xf32> to vector<1x8x1xf32>
    %57 = arith.subf %45, %56 : vector<1x8x1xf32>
    %58 = math.exp %57 : vector<1x8x1xf32>
    %59 = vector.broadcast %58 : vector<1x8x1xf32> to vector<1x8x8xf32>
    %60 = arith.mulf %48, %59 : vector<1x8x8xf32>
    %61 = tpu.transpose %60, [0, 2, 1] : vector<1x8x8xf32> -> vector<1x8x8xf32>
    %cst_34 = arith.constant dense<0.000000e+00> : vector<1x8xf32>
    %62 = vector.multi_reduction <add>, %61, %cst_34 [2] : vector<1x8x8xf32> to vector<1x8xf32>
    %63 = vector.shape_cast %62 : vector<1x8xf32> to vector<1x8x1xf32>
    %64 = tpu.reciprocal %63 {approx = true} : vector<1x8x1xf32> -> vector<1x8x1xf32>
    %65 = vector.broadcast %64 : vector<1x8x1xf32> to vector<1x8x8xf32>
    %66 = arith.mulf %61, %65 : vector<1x8x8xf32>
    %67 = arith.truncf %53 : vector<1x8x8xf32> to vector<1x8x8xbf16>
    "tpu.trace_start"() <{level = 10 : i32, message = "bqk,bkc->bqc"}> : () -> ()
    %cst_35 = arith.constant dense<0.000000e+00> : vector<1x8x16xf32>
    %68 = tpu.matmul %67, %39, %cst_35 {dimension_numbers = #tpu.dot_dimension_numbers<[2], [1], [1], [2], [0, 0, 0, 1, 1, 2], [0], [0]>} : vector<1x8x8xbf16>, vector<1x8x16xbf16>, vector<1x8x16xf32> -> vector<1x8x16xf32>
    "tpu.trace_stop"() : () -> ()
    %69 = arith.truncf %66 : vector<1x8x8xf32> to vector<1x8x8xbf16>
    "tpu.trace_start"() <{level = 10 : i32, message = "bkq,bqc->bkc"}> : () -> ()
    %cst_36 = arith.constant dense<0.000000e+00> : vector<1x8x16xf32>
    %70 = tpu.matmul %69, %37, %cst_36 {dimension_numbers = #tpu.dot_dimension_numbers<[2], [1], [1], [2], [0, 0, 0, 1, 1, 2], [0], [0]>} : vector<1x8x8xbf16>, vector<1x8x16xbf16>, vector<1x8x16xf32> -> vector<1x8x16xf32>
    "tpu.trace_stop"() : () -> ()
    %71 = vector.extract_strided_slice %29 {offsets = [0, 0, 16], sizes = [1, 8, 16], strides = [1, 1, 1]} : vector<1x8x32xbf16> to vector<1x8x16xbf16>
    %72 = vector.extract_strided_slice %33 {offsets = [0, 0, 16], sizes = [1, 8, 16], strides = [1, 1, 1]} : vector<1x8x32xbf16> to vector<1x8x16xbf16>
    %73 = vector.extract_strided_slice %36 {offsets = [0, 0, 16], sizes = [1, 8, 16], strides = [1, 1, 1]} : vector<1x8x32xbf16> to vector<1x8x16xbf16>
    "tpu.trace_start"() <{level = 10 : i32, message = "bqc,bkc->bqk"}> : () -> ()
    %cst_37 = arith.constant dense<0.000000e+00> : vector<1x8x8xf32>
    %74 = tpu.matmul %71, %72, %cst_37 {dimension_numbers = #tpu.dot_dimension_numbers<[2], [2], [1], [1], [0, 0, 0, 1, 1, 1], [0], [0]>} : vector<1x8x16xbf16>, vector<1x8x16xbf16>, vector<1x8x8xf32> -> vector<1x8x8xf32>
    "tpu.trace_stop"() : () -> ()
    %c1 = arith.constant 1 : index
    %c0_38 = arith.constant 0 : index
    %c0_39 = arith.constant 0 : index
    %c0_40 = arith.constant 0 : index
    %75 = vector.load %arg13[%c1, %c0_38, %c0_39, %c0_40] : memref<2x1x8x8xf32, #tpu.memory_space<vmem>>, vector<1x1x8x8xf32>
    %76 = vector.shape_cast %75 : vector<1x1x8x8xf32> to vector<1x8x8xf32>
    %77 = vector.shape_cast %74 : vector<1x8x8xf32> to vector<1x1x8x8xf32>
    tpu.vector_store %arg13[%c1, %c0_38, %c0_39, %c0_40], %77 {strides = array<i32>} : memref<2x1x8x8xf32, #tpu.memory_space<vmem>>, vector<1x1x8x8xf32>,
    %cst_41 = arith.constant dense<0xFF800000> : vector<1x8xf32>
    %78 = vector.multi_reduction <maximumf>, %74, %cst_41 [2] : vector<1x8x8xf32> to vector<1x8xf32>
    %79 = vector.shape_cast %78 : vector<1x8xf32> to vector<1x8x1xf32>
    %80 = vector.broadcast %79 : vector<1x8x1xf32> to vector<1x8x8xf32>
    %81 = arith.subf %74, %80 : vector<1x8x8xf32>
    %82 = math.exp %81 : vector<1x8x8xf32>
    %cst_42 = arith.constant dense<0.000000e+00> : vector<1x8xf32>
    %83 = vector.multi_reduction <add>, %82, %cst_42 [2] : vector<1x8x8xf32> to vector<1x8xf32>
    %84 = vector.shape_cast %83 : vector<1x8xf32> to vector<1x8x1xf32>
    %85 = tpu.reciprocal %84 {approx = true} : vector<1x8x1xf32> -> vector<1x8x1xf32>
    %86 = vector.broadcast %85 : vector<1x8x1xf32> to vector<1x8x8xf32>
    %87 = arith.mulf %82, %86 : vector<1x8x8xf32>
    %cst_43 = arith.constant dense<0xFF800000> : vector<1x1xf32>
    %88 = vector.multi_reduction <maximumf>, %79, %cst_43 [1] : vector<1x8x1xf32> to vector<1x1xf32>
    %89 = vector.shape_cast %88 : vector<1x1xf32> to vector<1x1x1xf32>
    %90 = vector.broadcast %89 : vector<1x1x1xf32> to vector<1x8x1xf32>
    %91 = arith.subf %79, %90 : vector<1x8x1xf32>
    %92 = math.exp %91 : vector<1x8x1xf32>
    %93 = vector.broadcast %92 : vector<1x8x1xf32> to vector<1x8x8xf32>
    %94 = arith.mulf %82, %93 : vector<1x8x8xf32>
    %95 = tpu.transpose %94, [0, 2, 1] : vector<1x8x8xf32> -> vector<1x8x8xf32>
    %cst_44 = arith.constant dense<0.000000e+00> : vector<1x8xf32>
    %96 = vector.multi_reduction <add>, %95, %cst_44 [2] : vector<1x8x8xf32> to vector<1x8xf32>
    %97 = vector.shape_cast %96 : vector<1x8xf32> to vector<1x8x1xf32>
    %98 = tpu.reciprocal %97 {approx = true} : vector<1x8x1xf32> -> vector<1x8x1xf32>
    %99 = vector.broadcast %98 : vector<1x8x1xf32> to vector<1x8x8xf32>
    %100 = arith.mulf %95, %99 : vector<1x8x8xf32>
    %101 = arith.truncf %87 : vector<1x8x8xf32> to vector<1x8x8xbf16>
    "tpu.trace_start"() <{level = 10 : i32, message = "bqk,bkc->bqc"}> : () -> ()
    %cst_45 = arith.constant dense<0.000000e+00> : vector<1x8x16xf32>
    %102 = tpu.matmul %101, %73, %cst_45 {dimension_numbers = #tpu.dot_dimension_numbers<[2], [1], [1], [2], [0, 0, 0, 1, 1, 2], [0], [0]>} : vector<1x8x8xbf16>, vector<1x8x16xbf16>, vector<1x8x16xf32> -> vector<1x8x16xf32>
    "tpu.trace_stop"() : () -> ()
    %103 = arith.truncf %100 : vector<1x8x8xf32> to vector<1x8x8xbf16>
    "tpu.trace_start"() <{level = 10 : i32, message = "bkq,bqc->bkc"}> : () -> ()
    %cst_46 = arith.constant dense<0.000000e+00> : vector<1x8x16xf32>
    %104 = tpu.matmul %103, %71, %cst_46 {dimension_numbers = #tpu.dot_dimension_numbers<[2], [1], [1], [2], [0, 0, 0, 1, 1, 2], [0], [0]>} : vector<1x8x8xbf16>, vector<1x8x16xbf16>, vector<1x8x16xf32> -> vector<1x8x16xf32>
    "tpu.trace_stop"() : () -> ()
    %105 = tpu.concatenate %68, %102 in 2 : vector<1x8x16xf32>, vector<1x8x16xf32> -> vector<1x8x32xf32>
    %106 = tpu.concatenate %70, %104 in 2 : vector<1x8x16xf32>, vector<1x8x16xf32> -> vector<1x8x32xf32>
    %107 = vector.extract_strided_slice %8 {offsets = [0, 32], sizes = [8, 32], strides = [1, 1]} : vector<8x64xf32> to vector<8x32xf32>
    %108 = vector.shape_cast %107 : vector<8x32xf32> to vector<1x8x32xf32>
    %109 = arith.addf %105, %108 : vector<1x8x32xf32>
    %110 = vector.extract_strided_slice %26 {offsets = [0, 32], sizes = [8, 32], strides = [1, 1]} : vector<8x64xf32> to vector<8x32xf32>
    %111 = vector.shape_cast %110 : vector<8x32xf32> to vector<1x8x32xf32>
    %112 = arith.addf %106, %111 : vector<1x8x32xf32>
    %113 = arith.addf %109, %112 : vector<1x8x32xf32>
    %cst_47 = arith.constant 0.000000e+00 : f32
    %114 = vector.broadcast %cst_47 : f32 to vector<1x8x32xf32>
    %115 = arith.maximumf %113, %114 : vector<1x8x32xf32>
    %cst_48 = arith.constant dense<0.000000e+00> : vector<1x8xf32>
    %116 = vector.multi_reduction <add>, %115, %cst_48 [2] : vector<1x8x32xf32> to vector<1x8xf32>
    %117 = vector.shape_cast %116 : vector<1x8xf32> to vector<1x8x1xf32>
    %cst_49 = arith.constant 3.200000e+01 : f32
    %118 = vector.broadcast %cst_49 : f32 to vector<1x8x1xf32>
    %119 = arith.divf %117, %118 : vector<1x8x1xf32>
    %120 = vector.broadcast %119 : vector<1x8x1xf32> to vector<1x8x32xf32>
    %121 = arith.subf %115, %120 : vector<1x8x32xf32>
    %122 = arith.mulf %121, %121 : vector<1x8x32xf32>
    %cst_50 = arith.constant dense<0.000000e+00> : vector<1x8xf32>
    %123 = vector.multi_reduction <add>, %122, %cst_50 [2] : vector<1x8x32xf32> to vector<1x8xf32>
    %124 = vector.shape_cast %123 : vector<1x8xf32> to vector<1x8x1xf32>
    %cst_51 = arith.constant 3.200000e+01 : f32
    %125 = vector.broadcast %cst_51 : f32 to vector<1x8x1xf32>
    %126 = arith.divf %124, %125 : vector<1x8x1xf32>
    %127 = vector.broadcast %119 : vector<1x8x1xf32> to vector<1x8x32xf32>
    %128 = arith.subf %115, %127 : vector<1x8x32xf32>
    %cst_52 = arith.constant 9.99999974E-6 : f32
    %129 = vector.broadcast %cst_52 : f32 to vector<1x8x1xf32>
    %130 = arith.addf %126, %129 : vector<1x8x1xf32>
    %131 = math.rsqrt %130 : vector<1x8x1xf32>
    %132 = vector.broadcast %131 : vector<1x8x1xf32> to vector<1x8x32xf32>
    %133 = arith.mulf %128, %132 : vector<1x8x32xf32>
    %c0_53 = arith.constant 0 : index
    %c0_54 = arith.constant 0 : index
    %134 = vector.load %arg10[%c0_53, %c0_54] : memref<1x32xf32, #tpu.memory_space<vmem>>, vector<1x32xf32>
    %135 = vector.shape_cast %134 : vector<1x32xf32> to vector<1x1x32xf32>
    %136 = vector.broadcast %135 : vector<1x1x32xf32> to vector<1x8x32xf32>
    %137 = arith.mulf %133, %136 : vector<1x8x32xf32>
    %c0_55 = arith.constant 0 : index
    %c0_56 = arith.constant 0 : index
    %138 = vector.load %arg11[%c0_55, %c0_56] : memref<1x32xf32, #tpu.memory_space<vmem>>, vector<1x32xf32>
    %139 = vector.shape_cast %138 : vector<1x32xf32> to vector<1x1x32xf32>
    %140 = vector.broadcast %139 : vector<1x1x32xf32> to vector<1x8x32xf32>
    %141 = arith.addf %137, %140 : vector<1x8x32xf32>
    %c0_57 = arith.constant 0 : index
    %c0_58 = arith.constant 0 : index
    %c0_59 = arith.constant 0 : index
    %142 = vector.load %arg12[%c0_57, %c0_58, %c0_59] : memref<1x8x32xf32, #tpu.memory_space<vmem>>, vector<1x8x32xf32>
    tpu.vector_store %arg12[%c0_57, %c0_58, %c0_59], %141 {strides = array<i32>} : memref<1x8x32xf32, #tpu.memory_space<vmem>>, vector<1x8x32xf32>,
    return
  }
  func.func @transform_0(%arg0: i32) -> (i32, i32, i32) {
    %c0_i32 = arith.constant 0 : i32
    %c0_i32_0 = arith.constant 0 : i32
    %c0_i32_1 = arith.constant 0 : i32
    return %arg0, %c0_i32, %c0_i32_0 : i32, i32, i32
  }
  func.func @transform_1(%arg0: i32) -> (i32, i32, i32) {
    %c0_i32 = arith.constant 0 : i32
    %c0_i32_0 = arith.constant 0 : i32
    %c0_i32_1 = arith.constant 0 : i32
    return %arg0, %c0_i32, %c0_i32_0 : i32, i32, i32
  }
  func.func @transform_2(%arg0: i32) -> (i32, i32, i32) {
    %c0_i32 = arith.constant 0 : i32
    %c0_i32_0 = arith.constant 0 : i32
    %c0_i32_1 = arith.constant 0 : i32
    return %arg0, %c0_i32, %c0_i32_0 : i32, i32, i32
  }
  func.func @transform_3(%arg0: i32) -> (i32, i32) {
    %c0_i32 = arith.constant 0 : i32
    %c0_i32_0 = arith.constant 0 : i32
    %c0_i32_1 = arith.constant 0 : i32
    return %c0_i32, %c0_i32_0 : i32, i32
  }
  func.func @transform_4(%arg0: i32) -> (i32, i32) {
    %c0_i32 = arith.constant 0 : i32
    %c0_i32_0 = arith.constant 0 : i32
    %c0_i32_1 = arith.constant 0 : i32
    return %c0_i32, %c0_i32_0 : i32, i32
  }
  func.func @transform_5(%arg0: i32) -> (i32, i32) {
    %c0_i32 = arith.constant 0 : i32
    %c0_i32_0 = arith.constant 0 : i32
    %c0_i32_1 = arith.constant 0 : i32
    return %c0_i32, %c0_i32_0 : i32, i32
  }
  func.func @transform_6(%arg0: i32) -> (i32, i32) {
    %c0_i32 = arith.constant 0 : i32
    %c0_i32_0 = arith.constant 0 : i32
    %c0_i32_1 = arith.constant 0 : i32
    return %c0_i32, %c0_i32_0 : i32, i32
  }
  func.func @transform_7(%arg0: i32) -> (i32, i32) {
    %c0_i32 = arith.constant 0 : i32
    %c0_i32_0 = arith.constant 0 : i32
    %c0_i32_1 = arith.constant 0 : i32
    return %c0_i32, %c0_i32_0 : i32, i32
  }
  func.func @transform_8(%arg0: i32) -> (i32, i32) {
    %c0_i32 = arith.constant 0 : i32
    %c0_i32_0 = arith.constant 0 : i32
    %c0_i32_1 = arith.constant 0 : i32
    return %c0_i32, %c0_i32_0 : i32, i32
  }
  func.func @transform_9(%arg0: i32) -> (i32, i32) {
    %c0_i32 = arith.constant 0 : i32
    %c0_i32_0 = arith.constant 0 : i32
    %c0_i32_1 = arith.constant 0 : i32
    return %c0_i32, %c0_i32_0 : i32, i32
  }
  func.func @transform_10(%arg0: i32) -> (i32, i32) {
    %c0_i32 = arith.constant 0 : i32
    %c0_i32_0 = arith.constant 0 : i32
    %c0_i32_1 = arith.constant 0 : i32
    return %c0_i32, %c0_i32_0 : i32, i32
  }
  func.func @transform_11(%arg0: i32) -> (i32, i32, i32) {
    %c0_i32 = arith.constant 0 : i32
    %c0_i32_0 = arith.constant 0 : i32
    %c0_i32_1 = arith.constant 0 : i32
    return %arg0, %c0_i32, %c0_i32_0 : i32, i32, i32
  }
  func.func @transform_12(%arg0: i32) -> (i32, i32, i32, i32) {
    %c0_i32 = arith.constant 0 : i32
    %c0_i32_0 = arith.constant 0 : i32
    %c0_i32_1 = arith.constant 0 : i32
    %c0_i32_2 = arith.constant 0 : i32
    return %c0_i32, %arg0, %c0_i32_0, %c0_i32_1 : i32, i32, i32, i32
  }
}

</mosaic_0001>

<llo_original>
// kernel: tpu_custom_call.1
$region0: #{tpu_custom_call.1}
  #allocation0 [shape = 'u32[]', space=smem, size = 0x4, offset = 0x4, fixed_abs, tag = 'smem constant byte address 0x4 - core index']
  #allocation1 [shape = 'u32[144,128]{1,0:T(1,128)}', space=vmem, size = 0x12000, scoped, tag = 'internal scratch']
  %s0 = inlined_call_operand.hbm [shape: bf16[2,8,32], index: 0, kind: input, shape index: {}]
  %s1 = inlined_call_operand.hbm [shape: bf16[2,8,32], index: 1, kind: input, shape index: {}]
  %s2 = inlined_call_operand.hbm [shape: bf16[2,8,32], index: 2, kind: input, shape index: {}]
  %s3 = inlined_call_operand.hbm [shape: bf16[32,64], index: 3, kind: input, shape index: {}]
  %s4 = inlined_call_operand.hbm [shape: f32[1,64], index: 4, kind: input, shape index: {}]
  %s5 = inlined_call_operand.hbm [shape: bf16[32,32], index: 5, kind: input, shape index: {}]
  %s6 = inlined_call_operand.hbm [shape: f32[1,32], index: 6, kind: input, shape index: {}]
  %s7 = inlined_call_operand.hbm [shape: bf16[32,64], index: 7, kind: input, shape index: {}]
  %s8 = inlined_call_operand.hbm [shape: f32[1,64], index: 8, kind: input, shape index: {}]
  %s9 = inlined_call_operand.hbm [shape: f32[1,32], index: 9, kind: input, shape index: {}]
  %s10 = inlined_call_operand.hbm [shape: f32[1,32], index: 10, kind: input, shape index: {}]
  %s11 = inlined_call_operand.hbm [shape: f32[2,8,32], index: 11, kind: output, shape index: {0}]
  %s12 = inlined_call_operand.hbm [shape: f32[2,2,8,8], index: 12, kind: output, shape index: {1}]
  %13 = xla_tuple %s11, %s12
  %s14 = sld [smem:[#allocation0]]
  $region129: #{tpu_custom_call.1} parent=0
    _
  %s16 = ssub.s32 1, %s14
  %s17 = scalar_select 0, %s16, %s14
  $region1: #{tpu_custom_call.1} parent=0
    #allocation2 [shape = 'u8[4096]{0}', space=vmem, size = 0x1000, scoped, tag = 'input window, operand 0']
    #allocation3 [shape = 's32[2]{0}', space=sflag, size = 0x8, scoped, tag = 'scoped memory for tpu_custom_call.1']
    #allocation4 [shape = 's32[2]{0}', space=sflag, size = 0x8, scoped, tag = 'scoped memory for tpu_custom_call.1']
    #allocation5 [shape = 'u8[4096]{0}', space=vmem, size = 0x1000, scoped, tag = 'input window, operand 1']
    #allocation6 [shape = 's32[2]{0}', space=sflag, size = 0x8, scoped, tag = 'scoped memory for tpu_custom_call.1']
    #allocation7 [shape = 'u8[4096]{0}', space=vmem, size = 0x1000, scoped, tag = 'input window, operand 2']
    #allocation8 [shape = 'u8[8192]{0}', space=vmem, size = 0x2000, scoped, tag = 'input window, operand 3, single buffered']
    #allocation9 [shape = 's32[1]{0}', space=sflag, size = 0x4, scoped, tag = 'scoped memory for tpu_custom_call.1']
    #allocation10 [shape = 'u8[512]{0}', space=vmem, size = 0x400, scoped, tag = 'input window, operand 4, single buffered']
    #allocation11 [shape = 'u8[8192]{0}', space=vmem, size = 0x2000, scoped, tag = 'input window, operand 5, single buffered']
    #allocation12 [shape = 's32[1]{0}', space=sflag, size = 0x4, scoped, tag = 'scoped memory for tpu_custom_call.1']
    #allocation13 [shape = 'u8[512]{0}', space=vmem, size = 0x400, scoped, tag = 'input window, operand 6, single buffered']
    #allocation14 [shape = 'u8[8192]{0}', space=vmem, size = 0x2000, scoped, tag = 'input window, operand 7, single buffered']
    #allocation15 [shape = 's32[1]{0}', space=sflag, size = 0x4, scoped, tag = 'scoped memory for tpu_custom_call.1']
    #allocation16 [shape = 'u8[512]{0}', space=vmem, size = 0x400, scoped, tag = 'input window, operand 8, single buffered']
    #allocation17 [shape = 'u8[512]{0}', space=vmem, size = 0x400, scoped, tag = 'input window, operand 9, single buffered']
    #allocation18 [shape = 's32[1]{0}', space=sflag, size = 0x4, scoped, tag = 'scoped memory for tpu_custom_call.1']
    #allocation19 [shape = 'u8[512]{0}', space=vmem, size = 0x400, scoped, tag = 'input window, operand 10, single buffered']
    #allocation20 [shape = 'u8[8192]{0}', space=vmem, size = 0x2000, scoped, tag = 'output window, operand 0']
    #allocation21 [shape = 'u8[16384]{0}', space=vmem, size = 0x4000, scoped, tag = 'output window, operand 1']
    #allocation22 [shape = 's32[2]{0}', space=sflag, size = 0x8, scoped, tag = 'scoped memory for tpu_custom_call.1']
    %18 = vsyncpa [#allocation3], 0
    %s19 = scalar_lea.sflag [#allocation3], 1
    %20 = vsyncpa %s19, 0
    %21 = vsyncpa [#allocation6], 0
    %s22 = scalar_lea.sflag [#allocation6], 1
    %23 = vsyncpa %s22, 0
    %24 = vsyncpa [#allocation9], 0
    %25 = vsyncpa [#allocation12], 0
    %26 = vsyncpa [#allocation15], 0
    %27 = vsyncpa [#allocation18], 0
    %28 = vsyncpa [#allocation4], 0
    %s29 = scalar_lea.sflag [#allocation4], 1
    %30 = vsyncpa %s29, 0
    %31 = vsyncpa [#allocation22], 0
    %s32 = scalar_lea.sflag [#allocation22], 1
    %33 = vsyncpa %s32, 0
    loop: start=0, step=1, limit=4
    $region2: #{tpu_custom_call.1} parent=1 // loop_pre_header
      _
    $region3: #{tpu_custom_call.1} parent=1 // loop_header
      %s35 = sphi 0, %s39
      %p36 = scmp.ge.s32.totalorder %s35, 4
      %s45 = sphi 0, %s47
      %s48 = sphi 0, %s45
      %s49 = sphi 0, %s48
      %s65 = sphi 0, %s49
      %s71 = sphi 0, %s73
      %s74 = sphi 0, %s71
      %s75 = sphi 0, %s74
      %s91 = sphi 0, %s75
      %s97 = sphi 0, %s99
      %s100 = sphi 0, %s97
      %s101 = sphi 0, %s100
      %s117 = sphi 0, %s101
      %s121 = sphi 0, %s121
      %s123 = sphi 0, %s121
      %s124 = sphi 0, %s123
      %s138 = sphi 0, %s124
      %s142 = sphi 0, %s142
      %s144 = sphi 0, %s142
      %s145 = sphi 0, %s144
      %s159 = sphi 0, %s145
      %s163 = sphi 0, %s163
      %s165 = sphi 0, %s163
      %s166 = sphi 0, %s165
      %s180 = sphi 0, %s166
      %s184 = sphi 0, %s184
      %s186 = sphi 0, %s184
      %s187 = sphi 0, %s186
      %s201 = sphi 0, %s187
      %s205 = sphi 0, %s205
      %s207 = sphi 0, %s205
      %s208 = sphi 0, %s207
      %s222 = sphi 0, %s208
      %s226 = sphi 0, %s226
      %s228 = sphi 0, %s226
      %s229 = sphi 0, %s228
      %s243 = sphi 0, %s229
      %s247 = sphi 0, %s247
      %s249 = sphi 0, %s247
      %s250 = sphi 0, %s249
      %s264 = sphi 0, %s250
      %s268 = sphi 0, %s268
      %s270 = sphi 0, %s268
      %s271 = sphi 0, %s270
      %s285 = sphi 0, %s271
      %s291 = sphi 0, %s293
      %s294 = sphi 0, %s291
      %s295 = sphi 0, %s294
      %s311 = sphi 0, %s295
      %s317 = sphi 0, %s319
      %s320 = sphi 0, %s317
      %s321 = sphi 0, %s320
      %s337 = sphi 0, %s321
    $region4: #{tpu_custom_call.1} parent=1 // loop_header_branch
      %38 = sbr.rel (%p36) target = $region8
    $region5: #{tpu_custom_call.1} parent=1 // loop_body
      %s40 = ssub.s32 %s35, 1
      %s41 = ssub.s32 %s35, 2
      %s42 = sadd.s32 %s35, 1
      %s43 = ssub.s32 %s35, %s42
      %p44 = scmp.eq.s32.totalorder %s43, 0
      %s46 = sadd.s32 %s45, 1
      %s47 = scalar_select %p44, %s45, %s46
      %p50 = pneg %p44
      %p51 = scmp.eq.s32.totalorder %s35, 1
      %p52 = por %p50, %p51
      %p53 = scmp.ne.s32.totalorder %s45, %s48
      %p54 = scmp.eq.s32.totalorder %s35, 0
      %p55 = por %p53, %p54
      %p56 = scmp.ne.s32.totalorder %s45, %s48
      %p57 = scmp.eq.s32.totalorder %s40, 1
      %p58 = por %p56, %p57
      %p59 = scmp.ne.s32.totalorder %s48, %s49
      %p60 = scmp.eq.s32.totalorder %s40, 0
      %p61 = por %p59, %p60
      %p62 = scmp.ne.s32.totalorder %s48, %s49
      %p63 = scmp.eq.s32.totalorder %s41, 1
      %p64 = por %p62, %p63
      %p66 = scmp.ne.s32.totalorder %s49, %s65
      %p67 = scmp.eq.s32.totalorder %s41, 0
      %p68 = por %p66, %p67
      %s69 = ssub.s32 %s35, %s42
      %p70 = scmp.eq.s32.totalorder %s69, 0
      %s72 = sadd.s32 %s71, 1
      %s73 = scalar_select %p70, %s71, %s72
      %p76 = pneg %p70
      %p77 = scmp.eq.s32.totalorder %s35, 1
      %p78 = por %p76, %p77
      %p79 = scmp.ne.s32.totalorder %s71, %s74
      %p80 = scmp.eq.s32.totalorder %s35, 0
      %p81 = por %p79, %p80
      %p82 = scmp.ne.s32.totalorder %s71, %s74
      %p83 = scmp.eq.s32.totalorder %s40, 1
      %p84 = por %p82, %p83
      %p85 = scmp.ne.s32.totalorder %s74, %s75
      %p86 = scmp.eq.s32.totalorder %s40, 0
      %p87 = por %p85, %p86
      %p88 = scmp.ne.s32.totalorder %s74, %s75
      %p89 = scmp.eq.s32.totalorder %s41, 1
      %p90 = por %p88, %p89
      %p92 = scmp.ne.s32.totalorder %s75, %s91
      %p93 = scmp.eq.s32.totalorder %s41, 0
      %p94 = por %p92, %p93
      %s95 = ssub.s32 %s35, %s42
      %p96 = scmp.eq.s32.totalorder %s95, 0
      %s98 = sadd.s32 %s97, 1
      %s99 = scalar_select %p96, %s97, %s98
      %p102 = pneg %p96
      %p103 = scmp.eq.s32.totalorder %s35, 1
      %p104 = por %p102, %p103
      %p105 = scmp.ne.s32.totalorder %s97, %s100
      %p106 = scmp.eq.s32.totalorder %s35, 0
      %p107 = por %p105, %p106
      %p108 = scmp.ne.s32.totalorder %s97, %s100
      %p109 = scmp.eq.s32.totalorder %s40, 1
      %p110 = por %p108, %p109
      %p111 = scmp.ne.s32.totalorder %s100, %s101
      %p112 = scmp.eq.s32.totalorder %s40, 0
      %p113 = por %p111, %p112
      %p114 = scmp.ne.s32.totalorder %s100, %s101
      %p115 = scmp.eq.s32.totalorder %s41, 1
      %p116 = por %p114, %p115
      %p118 = scmp.ne.s32.totalorder %s101, %s117
      %p119 = scmp.eq.s32.totalorder %s41, 0
      %p120 = por %p118, %p119
      %s122 = sadd.s32 %s121, 1
      %p125 = scmp.eq.s32.totalorder %s35, 1
      %p126 = scmp.ne.s32.totalorder %s121, %s123
      %p127 = scmp.eq.s32.totalorder %s35, 0
      %p128 = por %p126, %p127
      %p129 = scmp.ne.s32.totalorder %s121, %s123
      %p130 = scmp.eq.s32.totalorder %s40, 1
      %p131 = por %p129, %p130
      %p132 = scmp.ne.s32.totalorder %s123, %s124
      %p133 = scmp.eq.s32.totalorder %s40, 0
      %p134 = por %p132, %p133
      %p135 = scmp.ne.s32.totalorder %s123, %s124
      %p136 = scmp.eq.s32.totalorder %s41, 1
      %p137 = por %p135, %p136
      %p139 = scmp.ne.s32.totalorder %s124, %s138
      %p140 = scmp.eq.s32.totalorder %s41, 0
      %p141 = por %p139, %p140
      %s143 = sadd.s32 %s142, 1
      %p146 = scmp.eq.s32.totalorder %s35, 1
      %p147 = scmp.ne.s32.totalorder %s142, %s144
      %p148 = scmp.eq.s32.totalorder %s35, 0
      %p149 = por %p147, %p148
      %p150 = scmp.ne.s32.totalorder %s142, %s144
      %p151 = scmp.eq.s32.totalorder %s40, 1
      %p152 = por %p150, %p151
      %p153 = scmp.ne.s32.totalorder %s144, %s145
      %p154 = scmp.eq.s32.totalorder %s40, 0
      %p155 = por %p153, %p154
      %p156 = scmp.ne.s32.totalorder %s144, %s145
      %p157 = scmp.eq.s32.totalorder %s41, 1
      %p158 = por %p156, %p157
      %p160 = scmp.ne.s32.totalorder %s145, %s159
      %p161 = scmp.eq.s32.totalorder %s41, 0
      %p162 = por %p160, %p161
      %s164 = sadd.s32 %s163, 1
      %p167 = scmp.eq.s32.totalorder %s35, 1
      %p168 = scmp.ne.s32.totalorder %s163, %s165
      %p169 = scmp.eq.s32.totalorder %s35, 0
      %p170 = por %p168, %p169
      %p171 = scmp.ne.s32.totalorder %s163, %s165
      %p172 = scmp.eq.s32.totalorder %s40, 1
      %p173 = por %p171, %p172
      %p174 = scmp.ne.s32.totalorder %s165, %s166
      %p175 = scmp.eq.s32.totalorder %s40, 0
      %p176 = por %p174, %p175
      %p177 = scmp.ne.s32.totalorder %s165, %s166
      %p178 = scmp.eq.s32.totalorder %s41, 1
      %p179 = por %p177, %p178
      %p181 = scmp.ne.s32.totalorder %s166, %s180
      %p182 = scmp.eq.s32.totalorder %s41, 0
      %p183 = por %p181, %p182
      %s185 = sadd.s32 %s184, 1
      %p188 = scmp.eq.s32.totalorder %s35, 1
      %p189 = scmp.ne.s32.totalorder %s184, %s186
      %p190 = scmp.eq.s32.totalorder %s35, 0
      %p191 = por %p189, %p190
      %p192 = scmp.ne.s32.totalorder %s184, %s186
      %p193 = scmp.eq.s32.totalorder %s40, 1
      %p194 = por %p192, %p193
      %p195 = scmp.ne.s32.totalorder %s186, %s187
      %p196 = scmp.eq.s32.totalorder %s40, 0
      %p197 = por %p195, %p196
      %p198 = scmp.ne.s32.totalorder %s186, %s187
      %p199 = scmp.eq.s32.totalorder %s41, 1
      %p200 = por %p198, %p199
      %p202 = scmp.ne.s32.totalorder %s187, %s201
      %p203 = scmp.eq.s32.totalorder %s41, 0
      %p204 = por %p202, %p203
      %s206 = sadd.s32 %s205, 1
      %p209 = scmp.eq.s32.totalorder %s35, 1
      %p210 = scmp.ne.s32.totalorder %s205, %s207
      %p211 = scmp.eq.s32.totalorder %s35, 0
      %p212 = por %p210, %p211
      %p213 = scmp.ne.s32.totalorder %s205, %s207
      %p214 = scmp.eq.s32.totalorder %s40, 1
      %p215 = por %p213, %p214
      %p216 = scmp.ne.s32.totalorder %s207, %s208
      %p217 = scmp.eq.s32.totalorder %s40, 0
      %p218 = por %p216, %p217
      %p219 = scmp.ne.s32.totalorder %s207, %s208
      %p220 = scmp.eq.s32.totalorder %s41, 1
      %p221 = por %p219, %p220
      %p223 = scmp.ne.s32.totalorder %s208, %s222
      %p224 = scmp.eq.s32.totalorder %s41, 0
      %p225 = por %p223, %p224
      %s227 = sadd.s32 %s226, 1
      %p230 = scmp.eq.s32.totalorder %s35, 1
      %p231 = scmp.ne.s32.totalorder %s226, %s228
      %p232 = scmp.eq.s32.totalorder %s35, 0
      %p233 = por %p231, %p232
      %p234 = scmp.ne.s32.totalorder %s226, %s228
      %p235 = scmp.eq.s32.totalorder %s40, 1
      %p236 = por %p234, %p235
      %p237 = scmp.ne.s32.totalorder %s228, %s229
      %p238 = scmp.eq.s32.totalorder %s40, 0
      %p239 = por %p237, %p238
      %p240 = scmp.ne.s32.totalorder %s228, %s229
      %p241 = scmp.eq.s32.totalorder %s41, 1
      %p242 = por %p240, %p241
      %p244 = scmp.ne.s32.totalorder %s229, %s243
      %p245 = scmp.eq.s32.totalorder %s41, 0
      %p246 = por %p244, %p245
      %s248 = sadd.s32 %s247, 1
      %p251 = scmp.eq.s32.totalorder %s35, 1
      %p252 = scmp.ne.s32.totalorder %s247, %s249
      %p253 = scmp.eq.s32.totalorder %s35, 0
      %p254 = por %p252, %p253
      %p255 = scmp.ne.s32.totalorder %s247, %s249
      %p256 = scmp.eq.s32.totalorder %s40, 1
      %p257 = por %p255, %p256
      %p258 = scmp.ne.s32.totalorder %s249, %s250
      %p259 = scmp.eq.s32.totalorder %s40, 0
      %p260 = por %p258, %p259
      %p261 = scmp.ne.s32.totalorder %s249, %s250
      %p262 = scmp.eq.s32.totalorder %s41, 1
      %p263 = por %p261, %p262
      %p265 = scmp.ne.s32.totalorder %s250, %s264
      %p266 = scmp.eq.s32.totalorder %s41, 0
      %p267 = por %p265, %p266
      %s269 = sadd.s32 %s268, 1
      %p272 = scmp.eq.s32.totalorder %s35, 1
      %p273 = scmp.ne.s32.totalorder %s268, %s270
      %p274 = scmp.eq.s32.totalorder %s35, 0
      %p275 = por %p273, %p274
      %p276 = scmp.ne.s32.totalorder %s268, %s270
      %p277 = scmp.eq.s32.totalorder %s40, 1
      %p278 = por %p276, %p277
      %p279 = scmp.ne.s32.totalorder %s270, %s271
      %p280 = scmp.eq.s32.totalorder %s40, 0
      %p281 = por %p279, %p280
      %p282 = scmp.ne.s32.totalorder %s270, %s271
      %p283 = scmp.eq.s32.totalorder %s41, 1
      %p284 = por %p282, %p283
      %p286 = scmp.ne.s32.totalorder %s271, %s285
      %p287 = scmp.eq.s32.totalorder %s41, 0
      %p288 = por %p286, %p287
      %s289 = ssub.s32 %s35, %s42
      %p290 = scmp.eq.s32.totalorder %s289, 0
      %s292 = sadd.s32 %s291, 1
      %s293 = scalar_select %p290, %s291, %s292
      %p296 = pneg %p290
      %p297 = scmp.eq.s32.totalorder %s35, 1
      %p298 = por %p296, %p297
      %p299 = scmp.ne.s32.totalorder %s291, %s294
      %p300 = scmp.eq.s32.totalorder %s35, 0
      %p301 = por %p299, %p300
      %p302 = scmp.ne.s32.totalorder %s291, %s294
      %p303 = scmp.eq.s32.totalorder %s40, 1
      %p304 = por %p302, %p303
      %p305 = scmp.ne.s32.totalorder %s294, %s295
      %p306 = scmp.eq.s32.totalorder %s40, 0
      %p307 = por %p305, %p306
      %p308 = scmp.ne.s32.totalorder %s294, %s295
      %p309 = scmp.eq.s32.totalorder %s41, 1
      %p310 = por %p308, %p309
      %p312 = scmp.ne.s32.totalorder %s295, %s311
      %p313 = scmp.eq.s32.totalorder %s41, 0
      %p314 = por %p312, %p313
      %s315 = ssub.s32 %s35, %s42
      %p316 = scmp.eq.s32.totalorder %s315, 0
      %s318 = sadd.s32 %s317, 1
      %s319 = scalar_select %p316, %s317, %s318
      %p322 = pneg %p316
      %p323 = scmp.eq.s32.totalorder %s35, 1
      %p324 = por %p322, %p323
      %p325 = scmp.ne.s32.totalorder %s317, %s320
      %p326 = scmp.eq.s32.totalorder %s35, 0
      %p327 = por %p325, %p326
      %p328 = scmp.ne.s32.totalorder %s317, %s320
      %p329 = scmp.eq.s32.totalorder %s40, 1
      %p330 = por %p328, %p329
      %p331 = scmp.ne.s32.totalorder %s320, %s321
      %p332 = scmp.eq.s32.totalorder %s40, 0
      %p333 = por %p331, %p332
      %p334 = scmp.ne.s32.totalorder %s320, %s321
      %p335 = scmp.eq.s32.totalorder %s41, 1
      %p336 = por %p334, %p335
      %p338 = scmp.ne.s32.totalorder %s321, %s337
      %p339 = scmp.eq.s32.totalorder %s41, 0
      %p340 = por %p338, %p339
      %p341 = scmp.le.s32.totalorder 1, %s35
      %p342 = scmp.lt.s32.totalorder %s35, 3
      %p343 = pnand %p341, %p342
      %p344 = pneg %p343
      // Predicated region
      $region9: #{tpu_custom_call.1} parent=5 // pred_check
        _
      $region10: #{tpu_custom_call.1} parent=5 // pred_check_branch
        %346 = sbr.rel (%p343) target = $region12
      $region11: #{tpu_custom_call.1} parent=5 // pred_region
        %s347 = ssub.s32 %s35, 1
        // Predicated region
        $region13: #{tpu_custom_call.1} parent=11 // pred_check
          %p348 = pneg %p134
        $region14: #{tpu_custom_call.1} parent=11 // pred_check_branch
          %350 = sbr.rel (%p348) target = $region16
        $region15: #{tpu_custom_call.1} parent=11 // pred_region
          %s352 = ssub.s32 256, 256
          %353 = vsyncadd [#allocation9], %s352
          %s354 = sshll.u32 [#allocation8], 4
          %s355 = int_to_ptr.vmem [resolvable:$true] %s354
          %360 = dma.hbm_to_vmem [thread:$0]  %s3, 256, %s355, [#allocation9], 64, 64, 4
        $region16: #{tpu_custom_call.1} parent=11 // pred_fallthru
          _
        // Predicated region
        $region17: #{tpu_custom_call.1} parent=11 // pred_check
          %p361 = pneg %p155
        $region18: #{tpu_custom_call.1} parent=11 // pred_check_branch
          %363 = sbr.rel (%p361) target = $region20
        $region19: #{tpu_custom_call.1} parent=11 // pred_region
          %s365 = ssub.s32 16, 16
          %366 = vsyncadd [#allocation9], %s365
          %s368 = sshll.u32 [#allocation10], 4
          %s369 = int_to_ptr.vmem [resolvable:$true] %s368
          %371 = dma.hbm_to_vmem [thread:$0]  %s4, 16, %s369, [#allocation9]
        $region20: #{tpu_custom_call.1} parent=11 // pred_fallthru
          _
        // Predicated region
        $region21: #{tpu_custom_call.1} parent=11 // pred_check
          %p372 = pneg %p176
        $region22: #{tpu_custom_call.1} parent=11 // pred_check_branch
          %374 = sbr.rel (%p372) target = $region24
        $region23: #{tpu_custom_call.1} parent=11 // pred_region
          %s376 = ssub.s32 256, 256
          %377 = vsyncadd [#allocation12], %s376
          %s378 = sshll.u32 [#allocation11], 4
          %s379 = int_to_ptr.vmem [resolvable:$true] %s378
          %384 = dma.hbm_to_vmem [thread:$0]  %s5, 256, %s379, [#allocation12], 64, 64, 4
        $region24: #{tpu_custom_call.1} parent=11 // pred_fallthru
          _
        // Predicated region
        $region25: #{tpu_custom_call.1} parent=11 // pred_check
          %p385 = pneg %p197
        $region26: #{tpu_custom_call.1} parent=11 // pred_check_branch
          %387 = sbr.rel (%p385) target = $region28
        $region27: #{tpu_custom_call.1} parent=11 // pred_region
          %s389 = ssub.s32 16, 16
          %390 = vsyncadd [#allocation12], %s389
          %s392 = sshll.u32 [#allocation13], 4
          %s393 = int_to_ptr.vmem [resolvable:$true] %s392
          %395 = dma.hbm_to_vmem [thread:$0]  %s6, 16, %s393, [#allocation12]
        $region28: #{tpu_custom_call.1} parent=11 // pred_fallthru
          _
        // Predicated region
        $region29: #{tpu_custom_call.1} parent=11 // pred_check
          %p396 = pneg %p218
        $region30: #{tpu_custom_call.1} parent=11 // pred_check_branch
          %398 = sbr.rel (%p396) target = $region32
        $region31: #{tpu_custom_call.1} parent=11 // pred_region
          %s400 = ssub.s32 256, 256
          %401 = vsyncadd [#allocation15], %s400
          %s402 = sshll.u32 [#allocation14], 4
          %s403 = int_to_ptr.vmem [resolvable:$true] %s402
          %408 = dma.hbm_to_vmem [thread:$0]  %s7, 256, %s403, [#allocation15], 64, 64, 4
        $region32: #{tpu_custom_call.1} parent=11 // pred_fallthru
          _
        // Predicated region
        $region33: #{tpu_custom_call.1} parent=11 // pred_check
          %p409 = pneg %p239
        $region34: #{tpu_custom_call.1} parent=11 // pred_check_branch
          %411 = sbr.rel (%p409) target = $region36
        $region35: #{tpu_custom_call.1} parent=11 // pred_region
          %s413 = ssub.s32 16, 16
          %414 = vsyncadd [#allocation15], %s413
          %s416 = sshll.u32 [#allocation16], 4
          %s417 = int_to_ptr.vmem [resolvable:$true] %s416
          %419 = dma.hbm_to_vmem [thread:$0]  %s8, 16, %s417, [#allocation15]
        $region36: #{tpu_custom_call.1} parent=11 // pred_fallthru
          _
        // Predicated region
        $region37: #{tpu_custom_call.1} parent=11 // pred_check
          %p420 = pneg %p260
        $region38: #{tpu_custom_call.1} parent=11 // pred_check_branch
          %422 = sbr.rel (%p420) target = $region40
        $region39: #{tpu_custom_call.1} parent=11 // pred_region
          %s424 = ssub.s32 16, 16
          %425 = vsyncadd [#allocation18], %s424
          %s427 = sshll.u32 [#allocation17], 4
          %s428 = int_to_ptr.vmem [resolvable:$true] %s427
          %430 = dma.hbm_to_vmem [thread:$0]  %s9, 16, %s428, [#allocation18]
        $region40: #{tpu_custom_call.1} parent=11 // pred_fallthru
          _
        // Predicated region
        $region41: #{tpu_custom_call.1} parent=11 // pred_check
          %p431 = pneg %p281
        $region42: #{tpu_custom_call.1} parent=11 // pred_check_branch
          %433 = sbr.rel (%p431) target = $region44
        $region43: #{tpu_custom_call.1} parent=11 // pred_region
          %s435 = ssub.s32 16, 16
          %436 = vsyncadd [#allocation18], %s435
          %s438 = sshll.u32 [#allocation19], 4
          %s439 = int_to_ptr.vmem [resolvable:$true] %s438
          %441 = dma.hbm_to_vmem [thread:$0]  %s10, 16, %s439, [#allocation18]
        $region44: #{tpu_custom_call.1} parent=11 // pred_fallthru
          _
      $region12: #{tpu_custom_call.1} parent=5 // pred_fallthru
        _
      %p442 = scmp.lt.s32.totalorder %s35, 2
      // Predicated region
      $region45: #{tpu_custom_call.1} parent=5 // pred_check
        %p443 = pneg %p442
      $region46: #{tpu_custom_call.1} parent=5 // pred_check_branch
        %445 = sbr.rel (%p443) target = $region48
      $region47: #{tpu_custom_call.1} parent=5 // pred_region
        // Predicated region
        $region49: #{tpu_custom_call.1} parent=47 // pred_check
          %p446 = pneg %p55
        $region50: #{tpu_custom_call.1} parent=47 // pred_check_branch
          %448 = sbr.rel (%p446) target = $region52
        $region51: #{tpu_custom_call.1} parent=47 // pred_region
          %s449 = sand.u32 %s45, 1
          %s450 = scalar_lea.sflag [#allocation3], %s449
          %s451 = sand.u32 %s45, 1
          %s452 = smul.addr %s451, 4
          %s453 = scalar_lea.vmem [#allocation2], %s452
          %s455 = ssub.s32 64, 64
          %456 = vsyncadd %s450, %s455
          %s457 = smul.addr %s35, 64
          %s458 = scalar_lea.hbm %s0, %s457
          %s460 = sshll.u32 %s453, 4
          %s461 = int_to_ptr.vmem [resolvable:$true] %s460
          %463 = dma.hbm_to_vmem [thread:$0]  %s458, 64, %s461, %s450
        $region52: #{tpu_custom_call.1} parent=47 // pred_fallthru
          _
        // Predicated region
        $region53: #{tpu_custom_call.1} parent=47 // pred_check
          %p464 = pneg %p81
        $region54: #{tpu_custom_call.1} parent=47 // pred_check_branch
          %466 = sbr.rel (%p464) target = $region56
        $region55: #{tpu_custom_call.1} parent=47 // pred_region
          %s467 = sand.u32 %s35, 1
          %s468 = scalar_lea.sflag [#allocation6], %s467
          %s469 = sand.u32 %s71, 1
          %s470 = smul.addr %s469, 4
          %s471 = scalar_lea.vmem [#allocation5], %s470
          %s473 = ssub.s32 64, 64
          %474 = vsyncadd %s468, %s473
          %s475 = smul.addr %s35, 64
          %s476 = scalar_lea.hbm %s1, %s475
          %s478 = sshll.u32 %s471, 4
          %s479 = int_to_ptr.vmem [resolvable:$true] %s478
          %481 = dma.hbm_to_vmem [thread:$0]  %s476, 64, %s479, %s468
        $region56: #{tpu_custom_call.1} parent=47 // pred_fallthru
          _
        // Predicated region
        $region57: #{tpu_custom_call.1} parent=47 // pred_check
          %p482 = pneg %p107
        $region58: #{tpu_custom_call.1} parent=47 // pred_check_branch
          %484 = sbr.rel (%p482) target = $region60
        $region59: #{tpu_custom_call.1} parent=47 // pred_region
          %s485 = sand.u32 %s35, 1
          %s486 = scalar_lea.sflag [#allocation6], %s485
          %s487 = sand.u32 %s97, 1
          %s488 = smul.addr %s487, 4
          %s489 = scalar_lea.vmem [#allocation7], %s488
          %s491 = ssub.s32 64, 64
          %492 = vsyncadd %s486, %s491
          %s493 = smul.addr %s35, 64
          %s494 = scalar_lea.hbm %s2, %s493
          %s496 = sshll.u32 %s489, 4
          %s497 = int_to_ptr.vmem [resolvable:$true] %s496
          %499 = dma.hbm_to_vmem [thread:$0]  %s494, 64, %s497, %s486
        $region60: #{tpu_custom_call.1} parent=47 // pred_fallthru
          _
      $region48: #{tpu_custom_call.1} parent=5 // pred_fallthru
        _
      %p500 = scmp.le.s32.totalorder 1, %s35
      %p501 = scmp.lt.s32.totalorder %s35, 3
      %p502 = pnand %p500, %p501
      %p503 = pneg %p502
      // Predicated region
      $region61: #{tpu_custom_call.1} parent=5 // pred_check
        _
      $region62: #{tpu_custom_call.1} parent=5 // pred_check_branch
        %505 = sbr.rel (%p502) target = $region64
      $region63: #{tpu_custom_call.1} parent=5 // pred_region
        %s506 = ssub.s32 %s35, 1
        %s507 = sand.u32 %s48, 1
        %s508 = scalar_lea.sflag [#allocation3], %s507
        %s509 = sand.u32 %s48, 1
        %s510 = smul.addr %s509, 4
        %s511 = scalar_lea.vmem [#allocation2], %s510
        // Predicated region
        $region65: #{tpu_custom_call.1} parent=63 // pred_check
          %p512 = pneg %p61
        $region66: #{tpu_custom_call.1} parent=63 // pred_check_branch
          %514 = sbr.rel (%p512) target = $region68
        $region67: #{tpu_custom_call.1} parent=63 // pred_region
          %515 = dma.done %s508, 64
        $region68: #{tpu_custom_call.1} parent=63 // pred_fallthru
          _
        %s516 = sand.u32 %s40, 1
        %s517 = scalar_lea.sflag [#allocation6], %s516
        %s518 = sand.u32 %s74, 1
        %s519 = smul.addr %s518, 4
        %s520 = scalar_lea.vmem [#allocation5], %s519
        // Predicated region
        $region69: #{tpu_custom_call.1} parent=63 // pred_check
          %p521 = pneg %p87
        $region70: #{tpu_custom_call.1} parent=63 // pred_check_branch
          %523 = sbr.rel (%p521) target = $region72
        $region71: #{tpu_custom_call.1} parent=63 // pred_region
          %524 = dma.done %s517, 64
        $region72: #{tpu_custom_call.1} parent=63 // pred_fallthru
          _
        %s525 = sand.u32 %s40, 1
        %s526 = scalar_lea.sflag [#allocation6], %s525
        %s527 = sand.u32 %s100, 1
        %s528 = smul.addr %s527, 4
        %s529 = scalar_lea.vmem [#allocation7], %s528
        // Predicated region
        $region73: #{tpu_custom_call.1} parent=63 // pred_check
          %p530 = pneg %p113
        $region74: #{tpu_custom_call.1} parent=63 // pred_check_branch
          %532 = sbr.rel (%p530) target = $region76
        $region75: #{tpu_custom_call.1} parent=63 // pred_region
          %533 = dma.done %s526, 64
        $region76: #{tpu_custom_call.1} parent=63 // pred_fallthru
          _
        // Predicated region
        $region77: #{tpu_custom_call.1} parent=63 // pred_check
          %p534 = pneg %p134
        $region78: #{tpu_custom_call.1} parent=63 // pred_check_branch
          %536 = sbr.rel (%p534) target = $region80
        $region79: #{tpu_custom_call.1} parent=63 // pred_region
          %537 = dma.done [#allocation9], 256
        $region80: #{tpu_custom_call.1} parent=63 // pred_fallthru
          _
        // Predicated region
        $region81: #{tpu_custom_call.1} parent=63 // pred_check
          %p538 = pneg %p155
        $region82: #{tpu_custom_call.1} parent=63 // pred_check_branch
          %540 = sbr.rel (%p538) target = $region84
        $region83: #{tpu_custom_call.1} parent=63 // pred_region
          %541 = dma.done [#allocation9], 16
        $region84: #{tpu_custom_call.1} parent=63 // pred_fallthru
          _
        // Predicated region
        $region85: #{tpu_custom_call.1} parent=63 // pred_check
          %p542 = pneg %p176
        $region86: #{tpu_custom_call.1} parent=63 // pred_check_branch
          %544 = sbr.rel (%p542) target = $region88
        $region87: #{tpu_custom_call.1} parent=63 // pred_region
          %545 = dma.done [#allocation12], 256
        $region88: #{tpu_custom_call.1} parent=63 // pred_fallthru
          _
        // Predicated region
        $region89: #{tpu_custom_call.1} parent=63 // pred_check
          %p546 = pneg %p197
        $region90: #{tpu_custom_call.1} parent=63 // pred_check_branch
          %548 = sbr.rel (%p546) target = $region92
        $region91: #{tpu_custom_call.1} parent=63 // pred_region
          %549 = dma.done [#allocation12], 16
        $region92: #{tpu_custom_call.1} parent=63 // pred_fallthru
          _
        // Predicated region
        $region93: #{tpu_custom_call.1} parent=63 // pred_check
          %p550 = pneg %p218
        $region94: #{tpu_custom_call.1} parent=63 // pred_check_branch
          %552 = sbr.rel (%p550) target = $region96
        $region95: #{tpu_custom_call.1} parent=63 // pred_region
          %553 = dma.done [#allocation15], 256
        $region96: #{tpu_custom_call.1} parent=63 // pred_fallthru
          _
        // Predicated region
        $region97: #{tpu_custom_call.1} parent=63 // pred_check
          %p554 = pneg %p239
        $region98: #{tpu_custom_call.1} parent=63 // pred_check_branch
          %556 = sbr.rel (%p554) target = $region100
        $region99: #{tpu_custom_call.1} parent=63 // pred_region
          %557 = dma.done [#allocation15], 16
        $region100: #{tpu_custom_call.1} parent=63 // pred_fallthru
          _
        // Predicated region
        $region101: #{tpu_custom_call.1} parent=63 // pred_check
          %p558 = pneg %p260
        $region102: #{tpu_custom_call.1} parent=63 // pred_check_branch
          %560 = sbr.rel (%p558) target = $region104
        $region103: #{tpu_custom_call.1} parent=63 // pred_region
          %561 = dma.done [#allocation18], 16
        $region104: #{tpu_custom_call.1} parent=63 // pred_fallthru
          _
        // Predicated region
        $region105: #{tpu_custom_call.1} parent=63 // pred_check
          %p562 = pneg %p281
        $region106: #{tpu_custom_call.1} parent=63 // pred_check_branch
          %564 = sbr.rel (%p562) target = $region108
        $region107: #{tpu_custom_call.1} parent=63 // pred_region
          %565 = dma.done [#allocation18], 16
        $region108: #{tpu_custom_call.1} parent=63 // pred_fallthru
          _
        %s566 = sand.u32 %s48, 1
        %s567 = scalar_lea.sflag [#allocation3], %s566
        %s568 = sand.u32 %s48, 1
        %s569 = smul.addr %s568, 4
        %s570 = scalar_lea.vmem [#allocation2], %s569
        %p571 = pneg %p61
        %p572 = pneg %p58
        %s573 = sand.u32 %s40, 1
        %s574 = scalar_lea.sflag [#allocation6], %s573
        %s575 = sand.u32 %s74, 1
        %s576 = smul.addr %s575, 4
        %s577 = scalar_lea.vmem [#allocation5], %s576
        %p578 = pneg %p87
        %p579 = pneg %p84
        %s580 = sand.u32 %s40, 1
        %s581 = scalar_lea.sflag [#allocation6], %s580
        %s582 = sand.u32 %s100, 1
        %s583 = smul.addr %s582, 4
        %s584 = scalar_lea.vmem [#allocation7], %s583
        %p585 = pneg %p113
        %p586 = pneg %p110
        %p587 = pneg %p134
        %p588 = pneg %p131
        %p589 = pneg %p155
        %p590 = pneg %p152
        %p591 = pneg %p176
        %p592 = pneg %p173
        %p593 = pneg %p197
        %p594 = pneg %p194
        %p595 = pneg %p218
        %p596 = pneg %p215
        %p597 = pneg %p239
        %p598 = pneg %p236
        %p599 = pneg %p260
        %p600 = pneg %p257
        %p601 = pneg %p281
        %p602 = pneg %p278
        %p603 = pneg %p307
        %p604 = pneg %p304
        %s605 = sand.u32 %s294, 1
        %s606 = scalar_lea.sflag [#allocation4], %s605
        %s607 = sand.u32 %s294, 1
        %s608 = smul.addr %s607, 8
        %s609 = scalar_lea.vmem [#allocation20], %s608
        %p610 = pneg %p333
        %p611 = pneg %p330
        %s612 = sand.u32 %s320, 1
        %s613 = scalar_lea.sflag [#allocation22], %s612
        %s614 = sand.u32 %s320, 1
        %s615 = smul.addr %s614, 16
        %s616 = scalar_lea.vmem [#allocation21], %s615
        %v618 = vld [vmem:[%s511] sm:$0xf]
        %v619 = vld [vmem:[#allocation8] sm:$0xf]
        %v620 = vld [vmem:[#allocation8 + $0x4] sm:$0xf]
        %v621 = vld [vmem:[#allocation8 + $0x8] sm:$0xf]
        %v622 = vld [vmem:[#allocation8 + $0xc] sm:$0xf]
        %v623 = vld [vmem:[#allocation10] sm:$0x1]
        %v625 = vlaneseq
        %v626 = vshrl.u32 %v625, 7
        %v627 = vsub.s32 0, %v626
        %v628 = vrot.slane %v623, %v627
        %v634 = vunpack.c.l.b16 %v619
        %v635 = vunpack.c.l.b16 %v620
        %v636 = vunpack.c.l.b16 %v621
        %v637 = vunpack.c.l.b16 %v622
        %v638 = vpack.c.b16 %v635, %v634
        %v639 = vpack.c.b16 %v637, %v636
        %vm642 = vcmask 261120
        %v644 = vsel %vm642, %v618, 0
        %646 = vmatprep.subr.bf16.mxu0 0
        %647 = vmatpush1.bf16.msra.mxu0 %v638
        %648 = vmatprep.subr.bf16.mxu0 0
        %649 = vmatpush1.bf16.msra.mxu0 %v639
        %650 = vmatprep.subr.bf16.mxu0 0
        %651 = vmatpush1.bf16.msra.mxu0 0
        %652 = vmatprep.subr.bf16.mxu0 0
        %653 = vmatpush1.bf16.msra.mxu0 0
        %654 = vmatprep.subr.bf16.mxu0 0
        %655 = vmatpush1.bf16.msra.mxu0 0
        %656 = vmatprep.subr.bf16.mxu0 0
        %657 = vmatpush1.bf16.msra.mxu0 0
        %658 = vmatprep.subr.bf16.mxu0 0
        %659 = vmatpush1.bf16.msra.mxu0 0
        %660 = vmatprep.subr.bf16.mxu0 0
        %661 = vmatpush1.bf16.msra.mxu0 0
        %662 = vmatprep.subr.bf16.mxu0 0
        %663 = vmatpush1.bf16.msra.mxu0 0
        %664 = vmatprep.subr.bf16.mxu0 0
        %665 = vmatpush1.bf16.msra.mxu0 0
        %666 = vmatprep.subr.bf16.mxu0 0
        %667 = vmatpush1.bf16.msra.mxu0 0
        %668 = vmatprep.subr.bf16.mxu0 0
        %669 = vmatpush1.bf16.msra.mxu0 0
        %670 = vmatprep.subr.bf16.mxu0 0
        %671 = vmatpush1.bf16.msra.mxu0 0
        %672 = vmatprep.subr.bf16.mxu0 0
        %673 = vmatpush1.bf16.msra.mxu0 0
        %674 = vmatprep.subr.bf16.mxu0 0
        %675 = vmatpush1.bf16.msra.mxu0 0
        %676 = vmatprep.subr.bf16.mxu0 0
        %677 = vmatpush1.bf16.msra.mxu0 0
        %678 = vmatprep.mubr.bf16.mxu0 0
        %679 = vmatmul.mubr.bf16.gmra.mrb[0].mxu0 %v644
        %v680 = vpop.f32.mrb[0].mxu0
        %v681 = vadd.f32 %v628, %v680
        %v682 = vpop.f32.mrb[0].mxu0
        %v683 = vpop.f32.mrb[0].mxu0
        %v684 = vpop.f32.mrb[0].mxu0
        %685 = vdwg.mxu0
        %v686 = vmax.f32 %v681, 0.0
        %v687 = vld [vmem:[%s520] sm:$0xf]
        %v688 = vld [vmem:[#allocation11] sm:$0xf]
        %v689 = vld [vmem:[#allocation11 + $0x4] sm:$0xf]
        %v690 = vld [vmem:[#allocation11 + $0x8] sm:$0xf]
        %v691 = vld [vmem:[#allocation11 + $0xc] sm:$0xf]
        %v692 = vld [vmem:[#allocation13] sm:$0x1]
        %v694 = vlaneseq
        %v695 = vshrl.u32 %v694, 7
        %v696 = vsub.s32 0, %v695
        %v697 = vrot.slane %v692, %v696
        %v703 = vunpack.c.l.b16 %v688
        %v704 = vunpack.c.l.b16 %v689
        %v705 = vunpack.c.l.b16 %v690
        %v706 = vunpack.c.l.b16 %v691
        %v707 = vpack.c.b16 %v704, %v703
        %v708 = vpack.c.b16 %v706, %v705
        %v712 = vsel %vm642, %v687, 0
        %714 = vmatprep.subr.bf16.mxu0 0
        %715 = vmatpush1.bf16.msra.mxu0 %v707
        %716 = vmatprep.subr.bf16.mxu0 0
        %717 = vmatpush1.bf16.msra.mxu0 %v708
        %718 = vmatprep.subr.bf16.mxu0 0
        %719 = vmatpush1.bf16.msra.mxu0 0
        %720 = vmatprep.subr.bf16.mxu0 0
        %721 = vmatpush1.bf16.msra.mxu0 0
        %722 = vmatprep.subr.bf16.mxu0 0
        %723 = vmatpush1.bf16.msra.mxu0 0
        %724 = vmatprep.subr.bf16.mxu0 0
        %725 = vmatpush1.bf16.msra.mxu0 0
        %726 = vmatprep.subr.bf16.mxu0 0
        %727 = vmatpush1.bf16.msra.mxu0 0
        %728 = vmatprep.subr.bf16.mxu0 0
        %729 = vmatpush1.bf16.msra.mxu0 0
        %730 = vmatprep.subr.bf16.mxu0 0
        %731 = vmatpush1.bf16.msra.mxu0 0
        %732 = vmatprep.subr.bf16.mxu0 0
        %733 = vmatpush1.bf16.msra.mxu0 0
        %734 = vmatprep.subr.bf16.mxu0 0
        %735 = vmatpush1.bf16.msra.mxu0 0
        %736 = vmatprep.subr.bf16.mxu0 0
        %737 = vmatpush1.bf16.msra.mxu0 0
        %738 = vmatprep.subr.bf16.mxu0 0
        %739 = vmatpush1.bf16.msra.mxu0 0
        %740 = vmatprep.subr.bf16.mxu0 0
        %741 = vmatpush1.bf16.msra.mxu0 0
        %742 = vmatprep.subr.bf16.mxu0 0
        %743 = vmatpush1.bf16.msra.mxu0 0
        %744 = vmatprep.subr.bf16.mxu0 0
        %745 = vmatpush1.bf16.msra.mxu0 0
        %746 = vmatprep.mubr.bf16.mxu0 0
        %747 = vmatmul.mubr.bf16.gmra.mrb[0].mxu0 %v712
        %v748 = vpop.f32.mrb[0].mxu0
        %v749 = vadd.f32 %v697, %v748
        %v750 = vpop.f32.mrb[0].mxu0
        %v751 = vpop.f32.mrb[0].mxu0
        %v752 = vpop.f32.mrb[0].mxu0
        %753 = vdwg.mxu0
        %v754 = vmax.f32 %v749, 0.0
        %v755 = vld [vmem:[%s529] sm:$0xf]
        %v756 = vld [vmem:[#allocation14] sm:$0xf]
        %v757 = vld [vmem:[#allocation14 + $0x4] sm:$0xf]
        %v758 = vld [vmem:[#allocation14 + $0x8] sm:$0xf]
        %v759 = vld [vmem:[#allocation14 + $0xc] sm:$0xf]
        %v760 = vld [vmem:[#allocation16] sm:$0x1]
        %v762 = vlaneseq
        %v763 = vshrl.u32 %v762, 7
        %v764 = vsub.s32 0, %v763
        %v765 = vrot.slane %v760, %v764
        %v771 = vunpack.c.l.b16 %v756
        %v772 = vunpack.c.l.b16 %v757
        %v773 = vunpack.c.l.b16 %v758
        %v774 = vunpack.c.l.b16 %v759
        %v775 = vpack.c.b16 %v772, %v771
        %v776 = vpack.c.b16 %v774, %v773
        %v780 = vsel %vm642, %v755, 0
        %782 = vmatprep.subr.bf16.mxu0 0
        %783 = vmatpush1.bf16.msra.mxu0 %v775
        %784 = vmatprep.subr.bf16.mxu0 0
        %785 = vmatpush1.bf16.msra.mxu0 %v776
        %786 = vmatprep.subr.bf16.mxu0 0
        %787 = vmatpush1.bf16.msra.mxu0 0
        %788 = vmatprep.subr.bf16.mxu0 0
        %789 = vmatpush1.bf16.msra.mxu0 0
        %790 = vmatprep.subr.bf16.mxu0 0
        %791 = vmatpush1.bf16.msra.mxu0 0
        %792 = vmatprep.subr.bf16.mxu0 0
        %793 = vmatpush1.bf16.msra.mxu0 0
        %794 = vmatprep.subr.bf16.mxu0 0
        %795 = vmatpush1.bf16.msra.mxu0 0
        %796 = vmatprep.subr.bf16.mxu0 0
        %797 = vmatpush1.bf16.msra.mxu0 0
        %798 = vmatprep.subr.bf16.mxu0 0
        %799 = vmatpush1.bf16.msra.mxu0 0
        %800 = vmatprep.subr.bf16.mxu0 0
        %801 = vmatpush1.bf16.msra.mxu0 0
        %802 = vmatprep.subr.bf16.mxu0 0
        %803 = vmatpush1.bf16.msra.mxu0 0
        %804 = vmatprep.subr.bf16.mxu0 0
        %805 = vmatpush1.bf16.msra.mxu0 0
        %806 = vmatprep.subr.bf16.mxu0 0
        %807 = vmatpush1.bf16.msra.mxu0 0
        %808 = vmatprep.subr.bf16.mxu0 0
        %809 = vmatpush1.bf16.msra.mxu0 0
        %810 = vmatprep.subr.bf16.mxu0 0
        %811 = vmatpush1.bf16.msra.mxu0 0
        %812 = vmatprep.subr.bf16.mxu0 0
        %813 = vmatpush1.bf16.msra.mxu0 0
        %814 = vmatprep.mubr.bf16.mxu0 0
        %815 = vmatmul.mubr.bf16.gmra.mrb[0].mxu0 %v780
        %v816 = vpop.f32.mrb[0].mxu0
        %v817 = vadd.f32 %v765, %v816
        %v818 = vpop.f32.mrb[0].mxu0
        %v819 = vpop.f32.mrb[0].mxu0
        %v820 = vpop.f32.mrb[0].mxu0
        %821 = vdwg.mxu0
        %v822 = vmax.f32 %v817, 0.0
        %v823 = vpack.c.bf16 %v686, %v686
        %v824 = vmul.f32 %v754, 0.25
        %v825 = vpack.c.bf16 %v824, %v824
        %v826 = vpack.c.bf16 %v822, %v822
        %vm827 = vcmask 130048
        %v829 = vsel %vm827, %v823, 0
        %v832 = vsel %vm827, %v825, 0
        %834 = vmatprep.subr.bf16.mxu0 0
        %835 = vmatpush1.bf16.xpose.msra.mxu0 %v832
        %836 = vmatprep.subr.bf16.mxu0 0
        %837 = vmatpush1.bf16.xpose.msra.mxu0 0
        %838 = vmatprep.subr.bf16.mxu0 0
        %839 = vmatpush1.bf16.xpose.msra.mxu0 0
        %840 = vmatprep.subr.bf16.mxu0 0
        %841 = vmatpush1.bf16.xpose.msra.mxu0 0
        %842 = vmatprep.subr.bf16.mxu0 0
        %843 = vmatpush1.bf16.xpose.msra.mxu0 0
        %844 = vmatprep.subr.bf16.mxu0 0
        %845 = vmatpush1.bf16.xpose.msra.mxu0 0
        %846 = vmatprep.subr.bf16.mxu0 0
        %847 = vmatpush1.bf16.xpose.msra.mxu0 0
        %848 = vmatprep.subr.bf16.mxu0 0
        %849 = vmatpush1.bf16.xpose.msra.mxu0 0
        %850 = vmatprep.subr.bf16.mxu0 0
        %851 = vmatpush1.bf16.xpose.msra.mxu0 0
        %852 = vmatprep.subr.bf16.mxu0 0
        %853 = vmatpush1.bf16.xpose.msra.mxu0 0
        %854 = vmatprep.subr.bf16.mxu0 0
        %855 = vmatpush1.bf16.xpose.msra.mxu0 0
        %856 = vmatprep.subr.bf16.mxu0 0
        %857 = vmatpush1.bf16.xpose.msra.mxu0 0
        %858 = vmatprep.subr.bf16.mxu0 0
        %859 = vmatpush1.bf16.xpose.msra.mxu0 0
        %860 = vmatprep.subr.bf16.mxu0 0
        %861 = vmatpush1.bf16.xpose.msra.mxu0 0
        %862 = vmatprep.subr.bf16.mxu0 0
        %863 = vmatpush1.bf16.xpose.msra.mxu0 0
        %864 = vmatprep.subr.bf16.mxu0 0
        %865 = vmatpush1.bf16.xpose.msra.mxu0 0
        %866 = vmatprep.mubr.bf16.mxu0 0
        %867 = vmatmul.mubr.bf16.gmra.mrb[0].mxu0 %v829
        %v868 = vpop.f32.mrb[0].mxu0
        %v869 = vadd.f32 0.0, %v868
        %v870 = vpop.f32.mrb[0].mxu0
        %v871 = vpop.f32.mrb[0].mxu0
        %v872 = vpop.f32.mrb[0].mxu0
        %873 = vdwg.mxu0
        %vm874 = vcmask 64512
        %875 = vst.msk [vmem:[%s616] sm:$0xff] %vm874, %v869
        %v876 = vsel %vm874, %v869, -inf
        %877 = vmax.xlane.f32.xlu0 %v876
        %v878 = vpop.xlane.xlu0 %877
        %v879 = vsub.f32 %v869, %v878
        %v880 = vmul.f32 %v879, 1.442695
        %v881 = vpow.pop %v880
        %v882 = vsel %vm874, %v881, 0.0
        %883 = vadd.xlane.f32.xlu0 %v882
        %v884 = vpop.xlane.xlu0 %883
        %v885 = vrcp.pop %v884
        %v886 = vmul.f32 %v881, %v885
        %v887 = vrot.slane %v878, 4
        %v888 = vmax.f32 %v878, %v887
        %v889 = vrot.slane %v888, 2
        %v890 = vmax.f32 %v888, %v889
        %v891 = vrot.slane %v890, 1
        %v892 = vmax.f32 %v890, %v891
        %v893 = vsub.f32 %v878, %v892
        %v894 = vmul.f32 %v893, 1.442695
        %v895 = vpow.pop %v894
        %v896 = vmul.f32 %v881, %v895
        %897 = vxpose.xlu0.b32.start [1/16] %v896, 128
        %898 = vxpose.xlu0.b32.cont [2/16] 0.0, 128
        %899 = vxpose.xlu0.b32.cont [3/16] 0.0, 128
        %900 = vxpose.xlu0.b32.cont [4/16] 0.0, 128
        %901 = vxpose.xlu0.b32.cont [5/16] 0.0, 128
        %902 = vxpose.xlu0.b32.cont [6/16] 0.0, 128
        %903 = vxpose.xlu0.b32.cont [7/16] 0.0, 128
        %904 = vxpose.xlu0.b32.cont [8/16] 0.0, 128
        %905 = vxpose.xlu0.b32.cont [9/16] 0.0, 128
        %906 = vxpose.xlu0.b32.cont [10/16] 0.0, 128
        %907 = vxpose.xlu0.b32.cont [11/16] 0.0, 128
        %908 = vxpose.xlu0.b32.cont [12/16] 0.0, 128
        %909 = vxpose.xlu0.b32.cont [13/16] 0.0, 128
        %910 = vxpose.xlu0.b32.cont [14/16] 0.0, 128
        %911 = vxpose.xlu0.b32.cont [15/16] 0.0, 128
        %912 = vxpose.xlu0.b32.end [16/16] 0.0, 128
        %v913 = vpop.trf.xlu0
        %v914 = vpop.trf.xlu0
        %v915 = vpop.trf.xlu0
        %v916 = vpop.trf.xlu0
        %v917 = vpop.trf.xlu0
        %v918 = vpop.trf.xlu0
        %v919 = vpop.trf.xlu0
        %v920 = vpop.trf.xlu0
        %v921 = vpop.trf.xlu0
        %v922 = vpop.trf.xlu0
        %v923 = vpop.trf.xlu0
        %v924 = vpop.trf.xlu0
        %v925 = vpop.trf.xlu0
        %v926 = vpop.trf.xlu0
        %v927 = vpop.trf.xlu0
        %v928 = vpop.trf.xlu0
        %v929 = vsel %vm874, %v913, 0.0
        %930 = vadd.xlane.f32.xlu0 %v929
        %v931 = vpop.xlane.xlu0 %930
        %v932 = vrcp.pop %v931
        %v933 = vmul.f32 %v913, %v932
        %v934 = vpack.c.bf16 %v886, %v886
        %v936 = vsel %vm874, %v934, 0
        %vm938 = vcmask 1043456
        %v940 = vsel %vm938, %v826, 0
        %942 = vmatprep.subr.bf16.mxu0 0
        %943 = vmatpush1.bf16.msra.mxu0 %v940
        %944 = vmatprep.subr.bf16.mxu0 0
        %945 = vmatpush1.bf16.msra.mxu0 0
        %946 = vmatprep.subr.bf16.mxu0 0
        %947 = vmatpush1.bf16.msra.mxu0 0
        %948 = vmatprep.subr.bf16.mxu0 0
        %949 = vmatpush1.bf16.msra.mxu0 0
        %950 = vmatprep.subr.bf16.mxu0 0
        %951 = vmatpush1.bf16.msra.mxu0 0
        %952 = vmatprep.subr.bf16.mxu0 0
        %953 = vmatpush1.bf16.msra.mxu0 0
        %954 = vmatprep.subr.bf16.mxu0 0
        %955 = vmatpush1.bf16.msra.mxu0 0
        %956 = vmatprep.subr.bf16.mxu0 0
        %957 = vmatpush1.bf16.msra.mxu0 0
        %958 = vmatprep.subr.bf16.mxu0 0
        %959 = vmatpush1.bf16.msra.mxu0 0
        %960 = vmatprep.subr.bf16.mxu0 0
        %961 = vmatpush1.bf16.msra.mxu0 0
        %962 = vmatprep.subr.bf16.mxu0 0
        %963 = vmatpush1.bf16.msra.mxu0 0
        %964 = vmatprep.subr.bf16.mxu0 0
        %965 = vmatpush1.bf16.msra.mxu0 0
        %966 = vmatprep.subr.bf16.mxu0 0
        %967 = vmatpush1.bf16.msra.mxu0 0
        %968 = vmatprep.subr.bf16.mxu0 0
        %969 = vmatpush1.bf16.msra.mxu0 0
        %970 = vmatprep.subr.bf16.mxu0 0
        %971 = vmatpush1.bf16.msra.mxu0 0
        %972 = vmatprep.subr.bf16.mxu0 0
        %973 = vmatpush1.bf16.msra.mxu0 0
        %974 = vmatprep.mubr.bf16.mxu0 0
        %975 = vmatmul.mubr.bf16.gmra.mrb[0].mxu0 %v936
        %v976 = vpop.f32.mrb[0].mxu0
        %v977 = vadd.f32 0.0, %v976
        %v978 = vpop.f32.mrb[0].mxu0
        %v979 = vpop.f32.mrb[0].mxu0
        %v980 = vpop.f32.mrb[0].mxu0
        %981 = vdwg.mxu0
        %v982 = vpack.c.bf16 %v933, %v933
        %v984 = vsel %vm874, %v982, 0
        %v986 = vsel %vm938, %v823, 0
        %988 = vmatprep.subr.bf16.mxu0 0
        %989 = vmatpush1.bf16.msra.mxu0 %v986
        %990 = vmatprep.subr.bf16.mxu0 0
        %991 = vmatpush1.bf16.msra.mxu0 0
        %992 = vmatprep.subr.bf16.mxu0 0
        %993 = vmatpush1.bf16.msra.mxu0 0
        %994 = vmatprep.subr.bf16.mxu0 0
        %995 = vmatpush1.bf16.msra.mxu0 0
        %996 = vmatprep.subr.bf16.mxu0 0
        %997 = vmatpush1.bf16.msra.mxu0 0
        %998 = vmatprep.subr.bf16.mxu0 0
        %999 = vmatpush1.bf16.msra.mxu0 0
        %1000 = vmatprep.subr.bf16.mxu0 0
        %1001 = vmatpush1.bf16.msra.mxu0 0
        %1002 = vmatprep.subr.bf16.mxu0 0
        %1003 = vmatpush1.bf16.msra.mxu0 0
        %1004 = vmatprep.subr.bf16.mxu0 0
        %1005 = vmatpush1.bf16.msra.mxu0 0
        %1006 = vmatprep.subr.bf16.mxu0 0
        %1007 = vmatpush1.bf16.msra.mxu0 0
        %1008 = vmatprep.subr.bf16.mxu0 0
        %1009 = vmatpush1.bf16.msra.mxu0 0
        %1010 = vmatprep.subr.bf16.mxu0 0
        %1011 = vmatpush1.bf16.msra.mxu0 0
        %1012 = vmatprep.subr.bf16.mxu0 0
        %1013 = vmatpush1.bf16.msra.mxu0 0
        %1014 = vmatprep.subr.bf16.mxu0 0
        %1015 = vmatpush1.bf16.msra.mxu0 0
        %1016 = vmatprep.subr.bf16.mxu0 0
        %1017 = vmatpush1.bf16.msra.mxu0 0
        %1018 = vmatprep.subr.bf16.mxu0 0
        %1019 = vmatpush1.bf16.msra.mxu0 0
        %1020 = vmatprep.mubr.bf16.mxu0 0
        %1021 = vmatmul.mubr.bf16.gmra.mrb[0].mxu0 %v984
        %v1022 = vpop.f32.mrb[0].mxu0
        %v1023 = vadd.f32 0.0, %v1022
        %v1024 = vpop.f32.mrb[0].mxu0
        %v1025 = vpop.f32.mrb[0].mxu0
        %v1026 = vpop.f32.mrb[0].mxu0
        %1027 = vdwg.mxu0
        %1029 = vrot.lane.b32.xlu0 %v823, 112
        %v1030 = vpop.permute.xlu0 %1029
        %1032 = vrot.lane.b32.xlu0 %v825, 112
        %v1033 = vpop.permute.xlu0 %1032
        %v1035 = vsel %vm827, %v1030, 0
        %v1038 = vsel %vm827, %v1033, 0
        %1040 = vmatprep.subr.bf16.mxu0 0
        %1041 = vmatpush1.bf16.xpose.msra.mxu0 %v1038
        %1042 = vmatprep.subr.bf16.mxu0 0
        %1043 = vmatpush1.bf16.xpose.msra.mxu0 0
        %1044 = vmatprep.subr.bf16.mxu0 0
        %1045 = vmatpush1.bf16.xpose.msra.mxu0 0
        %1046 = vmatprep.subr.bf16.mxu0 0
        %1047 = vmatpush1.bf16.xpose.msra.mxu0 0
        %1048 = vmatprep.subr.bf16.mxu0 0
        %1049 = vmatpush1.bf16.xpose.msra.mxu0 0
        %1050 = vmatprep.subr.bf16.mxu0 0
        %1051 = vmatpush1.bf16.xpose.msra.mxu0 0
        %1052 = vmatprep.subr.bf16.mxu0 0
        %1053 = vmatpush1.bf16.xpose.msra.mxu0 0
        %1054 = vmatprep.subr.bf16.mxu0 0
        %1055 = vmatpush1.bf16.xpose.msra.mxu0 0
        %1056 = vmatprep.subr.bf16.mxu0 0
        %1057 = vmatpush1.bf16.xpose.msra.mxu0 0
        %1058 = vmatprep.subr.bf16.mxu0 0
        %1059 = vmatpush1.bf16.xpose.msra.mxu0 0
        %1060 = vmatprep.subr.bf16.mxu0 0
        %1061 = vmatpush1.bf16.xpose.msra.mxu0 0
        %1062 = vmatprep.subr.bf16.mxu0 0
        %1063 = vmatpush1.bf16.xpose.msra.mxu0 0
        %1064 = vmatprep.subr.bf16.mxu0 0
        %1065 = vmatpush1.bf16.xpose.msra.mxu0 0
        %1066 = vmatprep.subr.bf16.mxu0 0
        %1067 = vmatpush1.bf16.xpose.msra.mxu0 0
        %1068 = vmatprep.subr.bf16.mxu0 0
        %1069 = vmatpush1.bf16.xpose.msra.mxu0 0
        %1070 = vmatprep.subr.bf16.mxu0 0
        %1071 = vmatpush1.bf16.xpose.msra.mxu0 0
        %1072 = vmatprep.mubr.bf16.mxu0 0
        %1073 = vmatmul.mubr.bf16.gmra.mrb[0].mxu0 %v1035
        %v1074 = vpop.f32.mrb[0].mxu0
        %v1075 = vadd.f32 0.0, %v1074
        %v1076 = vpop.f32.mrb[0].mxu0
        %v1077 = vpop.f32.mrb[0].mxu0
        %v1078 = vpop.f32.mrb[0].mxu0
        %1079 = vdwg.mxu0
        %s1080 = scalar_lea.vmem %s616, 8 [#allocation21]
        %1081 = vst.msk [vmem:[%s1080] sm:$0xff] %vm874, %v1075
        %v1082 = vsel %vm874, %v1075, -inf
        %1083 = vmax.xlane.f32.xlu0 %v1082
        %v1084 = vpop.xlane.xlu0 %1083
        %v1085 = vsub.f32 %v1075, %v1084
        %v1086 = vmul.f32 %v1085, 1.442695
        %v1087 = vpow.pop %v1086
        %v1088 = vsel %vm874, %v1087, 0.0
        %1089 = vadd.xlane.f32.xlu0 %v1088
        %v1090 = vpop.xlane.xlu0 %1089
        %v1091 = vrcp.pop %v1090
        %v1092 = vmul.f32 %v1087, %v1091
        %v1093 = vrot.slane %v1084, 4
        %v1094 = vmax.f32 %v1084, %v1093
        %v1095 = vrot.slane %v1094, 2
        %v1096 = vmax.f32 %v1094, %v1095
        %v1097 = vrot.slane %v1096, 1
        %v1098 = vmax.f32 %v1096, %v1097
        %v1099 = vsub.f32 %v1084, %v1098
        %v1100 = vmul.f32 %v1099, 1.442695
        %v1101 = vpow.pop %v1100
        %v1102 = vmul.f32 %v1087, %v1101
        %1103 = vxpose.xlu0.b32.start [1/16] %v1102, 128
        %1104 = vxpose.xlu0.b32.cont [2/16] 0.0, 128
        %1105 = vxpose.xlu0.b32.cont [3/16] 0.0, 128
        %1106 = vxpose.xlu0.b32.cont [4/16] 0.0, 128
        %1107 = vxpose.xlu0.b32.cont [5/16] 0.0, 128
        %1108 = vxpose.xlu0.b32.cont [6/16] 0.0, 128
        %1109 = vxpose.xlu0.b32.cont [7/16] 0.0, 128
        %1110 = vxpose.xlu0.b32.cont [8/16] 0.0, 128
        %1111 = vxpose.xlu0.b32.cont [9/16] 0.0, 128
        %1112 = vxpose.xlu0.b32.cont [10/16] 0.0, 128
        %1113 = vxpose.xlu0.b32.cont [11/16] 0.0, 128
        %1114 = vxpose.xlu0.b32.cont [12/16] 0.0, 128
        %1115 = vxpose.xlu0.b32.cont [13/16] 0.0, 128
        %1116 = vxpose.xlu0.b32.cont [14/16] 0.0, 128
        %1117 = vxpose.xlu0.b32.cont [15/16] 0.0, 128
        %1118 = vxpose.xlu0.b32.end [16/16] 0.0, 128
        %v1119 = vpop.trf.xlu0
        %v1120 = vpop.trf.xlu0
        %v1121 = vpop.trf.xlu0
        %v1122 = vpop.trf.xlu0
        %v1123 = vpop.trf.xlu0
        %v1124 = vpop.trf.xlu0
        %v1125 = vpop.trf.xlu0
        %v1126 = vpop.trf.xlu0
        %v1127 = vpop.trf.xlu0
        %v1128 = vpop.trf.xlu0
        %v1129 = vpop.trf.xlu0
        %v1130 = vpop.trf.xlu0
        %v1131 = vpop.trf.xlu0
        %v1132 = vpop.trf.xlu0
        %v1133 = vpop.trf.xlu0
        %v1134 = vpop.trf.xlu0
        %v1135 = vsel %vm874, %v1119, 0.0
        %1136 = vadd.xlane.f32.xlu0 %v1135
        %v1137 = vpop.xlane.xlu0 %1136
        %v1138 = vrcp.pop %v1137
        %v1139 = vmul.f32 %v1119, %v1138
        %v1140 = vpack.c.bf16 %v1092, %v1092
        %1142 = vrot.lane.b32.xlu0 %v826, 112
        %v1143 = vpop.permute.xlu0 %1142
        %v1145 = vsel %vm874, %v1140, 0
        %v1148 = vsel %vm938, %v1143, 0
        %1150 = vmatprep.subr.bf16.mxu0 0
        %1151 = vmatpush1.bf16.msra.mxu0 %v1148
        %1152 = vmatprep.subr.bf16.mxu0 0
        %1153 = vmatpush1.bf16.msra.mxu0 0
        %1154 = vmatprep.subr.bf16.mxu0 0
        %1155 = vmatpush1.bf16.msra.mxu0 0
        %1156 = vmatprep.subr.bf16.mxu0 0
        %1157 = vmatpush1.bf16.msra.mxu0 0
        %1158 = vmatprep.subr.bf16.mxu0 0
        %1159 = vmatpush1.bf16.msra.mxu0 0
        %1160 = vmatprep.subr.bf16.mxu0 0
        %1161 = vmatpush1.bf16.msra.mxu0 0
        %1162 = vmatprep.subr.bf16.mxu0 0
        %1163 = vmatpush1.bf16.msra.mxu0 0
        %1164 = vmatprep.subr.bf16.mxu0 0
        %1165 = vmatpush1.bf16.msra.mxu0 0
        %1166 = vmatprep.subr.bf16.mxu0 0
        %1167 = vmatpush1.bf16.msra.mxu0 0
        %1168 = vmatprep.subr.bf16.mxu0 0
        %1169 = vmatpush1.bf16.msra.mxu0 0
        %1170 = vmatprep.subr.bf16.mxu0 0
        %1171 = vmatpush1.bf16.msra.mxu0 0
        %1172 = vmatprep.subr.bf16.mxu0 0
        %1173 = vmatpush1.bf16.msra.mxu0 0
        %1174 = vmatprep.subr.bf16.mxu0 0
        %1175 = vmatpush1.bf16.msra.mxu0 0
        %1176 = vmatprep.subr.bf16.mxu0 0
        %1177 = vmatpush1.bf16.msra.mxu0 0
        %1178 = vmatprep.subr.bf16.mxu0 0
        %1179 = vmatpush1.bf16.msra.mxu0 0
        %1180 = vmatprep.subr.bf16.mxu0 0
        %1181 = vmatpush1.bf16.msra.mxu0 0
        %1182 = vmatprep.mubr.bf16.mxu0 0
        %1183 = vmatmul.mubr.bf16.gmra.mrb[0].mxu0 %v1145
        %v1184 = vpop.f32.mrb[0].mxu0
        %v1185 = vadd.f32 0.0, %v1184
        %v1186 = vpop.f32.mrb[0].mxu0
        %v1187 = vpop.f32.mrb[0].mxu0
        %v1188 = vpop.f32.mrb[0].mxu0
        %1189 = vdwg.mxu0
        %v1190 = vpack.c.bf16 %v1139, %v1139
        %v1192 = vsel %vm874, %v1190, 0
        %v1194 = vsel %vm938, %v1030, 0
        %1196 = vmatprep.subr.bf16.mxu0 0
        %1197 = vmatpush1.bf16.msra.mxu0 %v1194
        %1198 = vmatprep.subr.bf16.mxu0 0
        %1199 = vmatpush1.bf16.msra.mxu0 0
        %1200 = vmatprep.subr.bf16.mxu0 0
        %1201 = vmatpush1.bf16.msra.mxu0 0
        %1202 = vmatprep.subr.bf16.mxu0 0
        %1203 = vmatpush1.bf16.msra.mxu0 0
        %1204 = vmatprep.subr.bf16.mxu0 0
        %1205 = vmatpush1.bf16.msra.mxu0 0
        %1206 = vmatprep.subr.bf16.mxu0 0
        %1207 = vmatpush1.bf16.msra.mxu0 0
        %1208 = vmatprep.subr.bf16.mxu0 0
        %1209 = vmatpush1.bf16.msra.mxu0 0
        %1210 = vmatprep.subr.bf16.mxu0 0
        %1211 = vmatpush1.bf16.msra.mxu0 0
        %1212 = vmatprep.subr.bf16.mxu0 0
        %1213 = vmatpush1.bf16.msra.mxu0 0
        %1214 = vmatprep.subr.bf16.mxu0 0
        %1215 = vmatpush1.bf16.msra.mxu0 0
        %1216 = vmatprep.subr.bf16.mxu0 0
        %1217 = vmatpush1.bf16.msra.mxu0 0
        %1218 = vmatprep.subr.bf16.mxu0 0
        %1219 = vmatpush1.bf16.msra.mxu0 0
        %1220 = vmatprep.subr.bf16.mxu0 0
        %1221 = vmatpush1.bf16.msra.mxu0 0
        %1222 = vmatprep.subr.bf16.mxu0 0
        %1223 = vmatpush1.bf16.msra.mxu0 0
        %1224 = vmatprep.subr.bf16.mxu0 0
        %1225 = vmatpush1.bf16.msra.mxu0 0
        %1226 = vmatprep.subr.bf16.mxu0 0
        %1227 = vmatpush1.bf16.msra.mxu0 0
        %1228 = vmatprep.mubr.bf16.mxu0 0
        %1229 = vmatmul.mubr.bf16.gmra.mrb[0].mxu0 %v1192
        %v1230 = vpop.f32.mrb[0].mxu0
        %v1231 = vadd.f32 0.0, %v1230
        %v1232 = vpop.f32.mrb[0].mxu0
        %v1233 = vpop.f32.mrb[0].mxu0
        %v1234 = vpop.f32.mrb[0].mxu0
        %1235 = vdwg.mxu0
        %1237 = vrot.lane.b32.xlu0 %v1185, 16
        %v1238 = vpop.permute.xlu0 %1237
        %v1240 = vsel %vm827, %v977, %v1238
        %1242 = vrot.lane.b32.xlu0 %v1231, 16
        %v1243 = vpop.permute.xlu0 %1242
        %v1245 = vsel %vm827, %v1023, %v1243
        %1247 = vrot.lane.b32.xlu0 %v686, 96
        %v1248 = vpop.permute.xlu0 %1247
        %v1250 = vadd.f32 %v1240, %v1248
        %1252 = vrot.lane.b32.xlu0 %v822, 96
        %v1253 = vpop.permute.xlu0 %1252
        %v1255 = vadd.f32 %v1245, %v1253
        %v1256 = vadd.f32 %v1250, %v1255
        %v1257 = vmax.f32 %v1256, 0.0
        %v1258 = vsel %vm642, %v1257, 0.0
        %1259 = vadd.xlane.f32.xlu0 %v1258
        %v1260 = vpop.xlane.xlu0 %1259
        %v1261 = vrcp.pop 32.0
        %v1262 = vmul.f32 %v1260, %v1261
        %v1263 = vsub.f32 %v1257, %v1262
        %v1264 = vmul.f32 %v1263, %v1263
        %v1265 = vsel %vm642, %v1264, 0.0
        %1266 = vadd.xlane.f32.xlu0 %v1265
        %v1267 = vpop.xlane.xlu0 %1266
        %v1268 = vmul.f32 %v1267, %v1261
        %v1269 = vadd.f32 %v1268, 1e-05
        %v1270 = vrsqrt.pop %v1269
        %v1271 = vmul.f32 %v1263, %v1270
        %v1272 = vld [vmem:[#allocation17] sm:$0x1]
        %v1274 = vlaneseq
        %v1275 = vshrl.u32 %v1274, 7
        %v1276 = vsub.s32 0, %v1275
        %v1277 = vrot.slane %v1272, %v1276
        %v1279 = vmul.f32 %v1271, %v1277
        %v1280 = vld [vmem:[#allocation19] sm:$0x1]
        %v1282 = vlaneseq
        %v1283 = vshrl.u32 %v1282, 7
        %v1284 = vsub.s32 0, %v1283
        %v1285 = vrot.slane %v1280, %v1284
        %v1287 = vadd.f32 %v1279, %v1285
        %1288 = vst.msk [vmem:[%s609] sm:$0xff] %vm642, %v1287
        %s1289 = sand.u32 %s294, 1
        %s1290 = scalar_lea.sflag [#allocation4], %s1289
        %s1291 = sand.u32 %s294, 1
        %s1292 = smul.addr %s1291, 8
        %s1293 = scalar_lea.vmem [#allocation20], %s1292
        %s1294 = sand.u32 %s320, 1
        %s1295 = scalar_lea.sflag [#allocation22], %s1294
        %s1296 = sand.u32 %s320, 1
        %s1297 = smul.addr %s1296, 16
        %s1298 = scalar_lea.vmem [#allocation21], %s1297
        // Predicated region
        $region109: #{tpu_custom_call.1} parent=63 // pred_check
          %p1299 = pneg %p304
        $region110: #{tpu_custom_call.1} parent=63 // pred_check_branch
          %1301 = sbr.rel (%p1299) target = $region112
        $region111: #{tpu_custom_call.1} parent=63 // pred_region
          %s1303 = ssub.s32 128, 128
          %1304 = vsyncadd %s1290, %s1303
          %s1305 = smul.addr %s40, 128
          %s1306 = scalar_lea.hbm %s11, %s1305
          %s1308 = sshll.u32 %s1293, 4
          %s1309 = int_to_ptr.vmem [resolvable:$true] %s1308
          %1311 = dma.vmem_to_hbm [thread:$0]  %s1309, 128, %s1306, %s1290
        $region112: #{tpu_custom_call.1} parent=63 // pred_fallthru
          _
        // Predicated region
        $region113: #{tpu_custom_call.1} parent=63 // pred_check
          %p1312 = pneg %p330
        $region114: #{tpu_custom_call.1} parent=63 // pred_check_branch
          %1314 = sbr.rel (%p1312) target = $region116
        $region115: #{tpu_custom_call.1} parent=63 // pred_region
          %s1316 = ssub.s32 256, 256
          %1317 = vsyncadd %s1295, %s1316
          %s1318 = smul.addr %s40, 128
          %s1319 = scalar_lea.hbm %s12, %s1318
          %s1320 = sshll.u32 %s1298, 4
          %s1321 = int_to_ptr.vmem [resolvable:$true] %s1320
          %1326 = dma.vmem_to_hbm [thread:$0]  %s1321, 256, %s1319, %s1295, 128, 256, 8
        $region116: #{tpu_custom_call.1} parent=63 // pred_fallthru
          _
      $region64: #{tpu_custom_call.1} parent=5 // pred_fallthru
        _
      %p1327 = scmp.le.s32.totalorder 2, %s35
      // Predicated region
      $region117: #{tpu_custom_call.1} parent=5 // pred_check
        %p1328 = pneg %p1327
      $region118: #{tpu_custom_call.1} parent=5 // pred_check_branch
        %1330 = sbr.rel (%p1328) target = $region120
      $region119: #{tpu_custom_call.1} parent=5 // pred_region
        %s1331 = ssub.s32 %s35, 2
        // Predicated region
        $region121: #{tpu_custom_call.1} parent=119 // pred_check
          %p1332 = pneg %p310
        $region122: #{tpu_custom_call.1} parent=119 // pred_check_branch
          %1334 = sbr.rel (%p1332) target = $region124
        $region123: #{tpu_custom_call.1} parent=119 // pred_region
          %s1335 = sand.u32 %s295, 1
          %s1336 = scalar_lea.sflag [#allocation4], %s1335
          %s1337 = sand.u32 %s295, 1
          %s1338 = smul.addr %s1337, 8
          %s1339 = scalar_lea.vmem [#allocation20], %s1338
          %1340 = dma.done %s1336, 128
        $region124: #{tpu_custom_call.1} parent=119 // pred_fallthru
          _
        // Predicated region
        $region125: #{tpu_custom_call.1} parent=119 // pred_check
          %p1341 = pneg %p336
        $region126: #{tpu_custom_call.1} parent=119 // pred_check_branch
          %1343 = sbr.rel (%p1341) target = $region128
        $region127: #{tpu_custom_call.1} parent=119 // pred_region
          %s1344 = sand.u32 %s321, 1
          %s1345 = scalar_lea.sflag [#allocation22], %s1344
          %s1346 = sand.u32 %s321, 1
          %s1347 = smul.addr %s1346, 16
          %s1348 = scalar_lea.vmem [#allocation21], %s1347
          %1349 = dma.done %s1345, 256
        $region128: #{tpu_custom_call.1} parent=119 // pred_fallthru
          _
      $region120: #{tpu_custom_call.1} parent=5 // pred_fallthru
        _
    $region6: #{tpu_custom_call.1} parent=1 // loop_footer
      %s39 = sadd.s32 1, %s35
    $region7: #{tpu_custom_call.1} parent=1 // loop_footer_branch
      %34 = sbr.rel target = $region3
    $region8: #{tpu_custom_call.1} parent=1 // loop_exit
      _
    %1350 = vsyncpa [#allocation3], 1
    %s1351 = scalar_lea.sflag [#allocation3], 1
    %1352 = vsyncpa %s1351, 1
    %1353 = vsyncpa [#allocation6], 1
    %s1354 = scalar_lea.sflag [#allocation6], 1
    %1355 = vsyncpa %s1354, 1
    %1356 = vsyncpa [#allocation9], 1
    %1357 = vsyncpa [#allocation12], 1
    %1358 = vsyncpa [#allocation15], 1
    %1359 = vsyncpa [#allocation18], 1
    %1360 = vsyncpa [#allocation4], 1
    %s1361 = scalar_lea.sflag [#allocation4], 1
    %1362 = vsyncpa %s1361, 1
    %1363 = vsyncpa [#allocation22], 1
    %s1364 = scalar_lea.sflag [#allocation22], 1
    %1365 = vsyncpa %s1364, 1

</llo_original>
